<compile_context>
chip_gen: v5e
topology: v5e:2x2
jax: 0.10.0
libtpu: 0.0.40
codegen_flags: <defaults>
</compile_context>

<pallas_src>
import functools

import jax
import jax.numpy as jnp
import numpy as np
from jax import lax
from jax.experimental import pallas as pl
from jax.experimental.pallas import tpu as pltpu


def _round_up(v, m):
    return (v + m - 1) // m * m


def _tpu_generation():
    """Best-effort TPU generation (5/6/7); only used for tile-size tuning."""
    try:
        kind = jax.devices()[0].device_kind.lower()
    except Exception:
        return 6
    for token, gen in (("v7", 7), ("7x", 7), ("v6", 6), ("v5", 5), ("v4", 4)):
        if token in kind:
            return gen
    return 6


# ----------------------------- Pallas kernel ------------------------------ #
def _conv_bn_act_kernel(x_ref, w_ref, shift_ref, o_ref, *,
                        n_row_taps, n_col_taps, TH, OW_p, act):
    # x_ref:     (1, Hq, Wq, Cc_p)                 s2d / width-tap-packed image, bf16
    # w_ref:     (n_row_taps*n_col_taps, Cc_p, TCO) BN-scale-folded weights, bf16
    # shift_ref: (1, TCO)                           folded BN shift, f32
    # o_ref:     (1, TH, OW_p, TCO)
    row0 = pl.program_id(2) * TH
    if TH % 8 == 0:
        row0 = pl.multiple_of(row0, 8)        # aligned, unmasked vector loads
    cdim = x_ref.shape[-1]

    acc = None
    if n_col_taps == 1:
        # Width taps (if any) already live in the contraction axis; every slice below
        # starts at a static width offset of 0 -> no relayout copies.
        for di in range(n_row_taps):
            xs = x_ref[:, pl.ds(row0 + di, TH), pl.ds(0, OW_p), :]
            xs = xs.reshape(TH * OW_p, cdim)
            part = jnp.dot(xs, w_ref[di], preferred_element_type=jnp.float32)
            acc = part if acc is None else acc + part
    else:
        slab_rows = TH + n_row_taps - 1
        for dj in range(n_col_taps):
            # One (possibly unaligned) width slice + reshape per dj, hoisted out of the
            # row-tap loop; the row slices below are static and OW_p(>=8)-aligned.
            slab = x_ref[:, pl.ds(row0, slab_rows), pl.ds(dj, OW_p), :]
            slab = slab.reshape(slab_rows * OW_p, cdim)
            for di in range(n_row_taps):
                xs = slab[di * OW_p:di * OW_p + TH * OW_p, :]
                part = jnp.dot(xs, w_ref[di * n_col_taps + dj],
                               preferred_element_type=jnp.float32)
                acc = part if acc is None else acc + part

    y = acc + shift_ref[...]                  # BatchNorm (eval) shift; scale folded in W
    if act == "silu":
        y = y * jax.nn.sigmoid(y)             # f32 epilogue (EUP sigmoid)
    elif act == "relu":
        y = jnp.maximum(y, 0.0)
    elif act == "lrelu":
        y = jnp.where(y >= 0.0, y, 0.1 * y)
    else:
        raise ValueError(f"Unsupported act: {act}")

    o_ref[...] = y.reshape(o_ref.shape).astype(o_ref.dtype)


# ------------------------------- Wrapper ----------------------------------- #
@functools.partial(jax.jit, static_argnames=("ksize", "stride", "act",
                                              "out_dtype", "data_format"))
def base_conv_forward(x, conv_w, gamma, beta, run_mean, run_var, *,
                      ksize, stride, eps=1e-5, act="silu",
                      out_dtype=jnp.float32, data_format="NCHW"):
    """BaseConv forward: conv2d (no bias) -> BatchNorm2d(eval) -> activation.

    x: (N, Cin, H, W) if data_format=="NCHW" (PyTorch layout) else (N, H, W, Cin).
    conv_w: (Cout, Cin, K, K). Returns the same data_format, dtype `out_dtype`.
    """
    if data_format == "NCHW":
        N, Cin, H, W = x.shape
        x_nhwc = jnp.transpose(x.astype(jnp.bfloat16), (0, 2, 3, 1))
    elif data_format == "NHWC":
        N, H, W, Cin = x.shape
        x_nhwc = x.astype(jnp.bfloat16)
    else:
        raise ValueError(f"Unsupported data_format: {data_format}")

    Cout = conv_w.shape[0]
    K, s = int(ksize), int(stride)
    pad = (K - 1) // 2                          # PyTorch BaseConv padding (odd K)
    OH = (H + 2 * pad - K) // s + 1
    OW = (W + 2 * pad - K) // s + 1

    gen = _tpu_generation()

    # --- static tiling parameters ---
    Kq = -(-K // s)                             # spatial taps after space-to-depth
    Cq = s * s * Cin                            # contraction per tap after s2d
    pack_cols = (Kq > 1) and (Kq * Cq <= 128)   # fold width taps into the contraction
    n_row_taps = Kq
    n_col_taps = 1 if (pack_cols or Kq == 1) else Kq
    Cc = Kq * Cq if pack_cols else Cq           # contraction per dot
    Cc_p = _round_up(Cc, 128)                   # lane-aligned contraction dim

    Cout_p = _round_up(Cout, 128)               # lane-aligned output channels
    if gen <= 5:
        TCO = 128                               # v5e MXU is 4x128^2; wider only adds traffic
    else:
        TCO = 256 if Cout_p % 256 == 0 else 128
    C_tiles = Cout_p // TCO

    OW_p = _round_up(OW, 8)                     # sublane-aligned output width
    target_m = 256 if gen <= 5 else 512         # output rows*cols per grid step
    TH = max(1, min(OH, max(1, target_m // OW_p)))
    R = -(-OH // TH)
    OH_pad = R * TH

    # required s2d input extents incl. tail-tile padding + row/col halo
    Hq_req = OH_pad + Kq - 1
    Wq_req = OW_p + Kq - 1
    H_tot = _round_up(max(H + 2 * pad, Hq_req * s), s)
    W_tot = _round_up(max(W + 2 * pad, Wq_req * s), 16 * s)   # bf16: 16-row granule
    Hq_t = H_tot // s
    Wq_t = W_tot // s

    # --- input: zero-pad, space-to-depth by stride (already bf16) ---
    x_padded = jnp.pad(x_nhwc, ((0, 0),
                                (pad, H_tot - H - pad),
                                (pad, W_tot - W - pad),
                                (0, 0)))
    if s == 1:
        x_s2d = x_padded
    else:
        x_s2d = (x_padded.reshape(N, Hq_t, s, Wq_t, s, Cin)
                 .transpose(0, 1, 3, 2, 4, 5)
                 .reshape(N, Hq_t, Wq_t, Cq))

    if pack_cols:
        # x_in[n, hq, ow, dj*Cq + c] = x_s2d[n, hq, ow + dj, c]
        x_in = jnp.concatenate(
            [x_s2d[:, :, dj:dj + OW_p, :] for dj in range(Kq)], axis=-1)
    else:
        x_in = x_s2d
    x_in = jnp.pad(x_in, ((0, 0), (0, 0), (0, 0), (0, Cc_p - x_in.shape[-1])))

    # --- weights: fold BN scale, space-to-depth taps, (optionally) pack, pad, bf16 ---
    scale = gamma / jnp.sqrt(run_var + eps)                      # (Cout,)
    shift = beta - run_mean * scale                              # (Cout,)
    w = jnp.transpose(conv_w, (2, 3, 1, 0)) * scale[None, None, None, :]  # (K,K,Cin,Cout)
    Kpad = Kq * s
    w = jnp.pad(w, ((0, Kpad - K), (0, Kpad - K), (0, 0), (0, 0)))
    w = (w.reshape(Kq, s, Kq, s, Cin, Cout)
         .transpose(0, 2, 1, 3, 4, 5)
         .reshape(Kq * Kq, Cq, Cout))                            # tap index = di*Kq + dj
    if pack_cols:
        w = w.reshape(Kq, Kq * Cq, Cout)                         # dj folded into contraction
    w = jnp.pad(w, ((0, 0), (0, Cc_p - w.shape[1]), (0, Cout_p - Cout)))
    w = w.astype(jnp.bfloat16)
    n_taps_total = n_row_taps * n_col_taps                       # == w.shape[0]

    shift_p = jnp.pad(shift, (0, Cout_p - Cout)).reshape(1, Cout_p).astype(jnp.float32)

    # --- VMEM budget from actual block footprints (double-buffered by Pallas) ---
    Hx, Wx = x_in.shape[1], x_in.shape[2]
    out_itemsize = jnp.dtype(out_dtype).itemsize
    x_blk_bytes = Hx * Wx * Cc_p * 2
    w_blk_bytes = n_taps_total * Cc_p * TCO * 2
    o_blk_bytes = TH * OW_p * TCO * out_itemsize
    acc_bytes = TH * OW_p * TCO * 4
    slab_bytes = 0 if n_col_taps == 1 else (TH + Kq - 1) * OW_p * Cc_p * 2
    vmem_need = (2 * (x_blk_bytes + w_blk_bytes + o_blk_bytes + TCO * 4)
                 + acc_bytes + 2 * slab_bytes + (4 << 20))
    vmem_cap = (100 << 20) if gen <= 6 else (56 << 20)           # v7x: 64 MiB / TensorCore
    vmem_limit = int(min(max(vmem_need, 32 << 20), vmem_cap))

    kernel = functools.partial(_conv_bn_act_kernel,
                               n_row_taps=n_row_taps, n_col_taps=n_col_taps,
                               TH=TH, OW_p=OW_p, act=act)

    out = pl.pallas_call(
        kernel,
        out_shape=jax.ShapeDtypeStruct((N, OH_pad, OW_p, Cout_p), out_dtype),
        grid_spec=pltpu.PrefetchScalarGridSpec(
            num_scalar_prefetch=0,
            # Row tiles innermost: weight/shift block indices are constant across r,
            # so they are DMA'd once per (n, c), not once per grid step.
            grid=(N, C_tiles, R),
            in_specs=[
                # full (s2d / packed) image; constant per n -> DMA'd once per image
                pl.BlockSpec((1, Hx, Wx, Cc_p), lambda n, c, r: (n, 0, 0, 0)),
                pl.BlockSpec((n_taps_total, Cc_p, TCO), lambda n, c, r: (0, 0, c)),
                pl.BlockSpec((1, TCO), lambda n, c, r: (0, c)),
            ],
            out_specs=pl.BlockSpec((1, TH, OW_p, TCO),
                                   lambda n, c, r: (n, r, 0, c)),
        ),
        compiler_params=pltpu.CompilerParams(
            # all output blocks are disjoint and there is no carried state, so every
            # axis is legally parallel (lets v7x's 2 TensorCores share work at N=1)
            dimension_semantics=("parallel", "parallel", "parallel"),
            vmem_limit_bytes=vmem_limit,
        ),
    )(x_in, w, shift_p)

    # strip padding; return in the requested layout / dtype
    out = out[:, :OH, :OW, :Cout]
    if data_format == "NCHW":
        out = jnp.transpose(out, (0, 3, 1, 2))
    return out


# ------------------------------- Reference --------------------------------- #
def base_conv_reference(x, conv_w, gamma, beta, run_mean, run_var,
                        ksize, stride, eps=1e-5, match_bf16=True):
    """Plain-JAX reference. With match_bf16=True the conv inputs are quantized to bf16
    (same as the kernel's MXU inputs) so the comparison is tight."""
    pad = (ksize - 1) // 2
    scale = gamma / jnp.sqrt(run_var + eps)
    shift = beta - run_mean * scale
    w_eff = conv_w * scale[:, None, None, None]
    xr = x
    if match_bf16:
        xr = xr.astype(jnp.bfloat16).astype(jnp.float32)
        w_eff = w_eff.astype(jnp.bfloat16).astype(jnp.float32)
    y = lax.conv_general_dilated(
        xr, w_eff, window_strides=(stride, stride),
        padding=((pad, pad), (pad, pad)),
        dimension_numbers=("NCHW", "OIHW", "NCHW"),
        precision=lax.Precision.HIGHEST)
    y = y + shift[None, :, None, None]
    return y * jax.nn.sigmoid(y)


# --------------------------------- Main ------------------------------------ #
if __name__ == "__main__":
    key = jax.random.PRNGKey(0)

    def make_case(key, N, Cin, H, W, Cout, ksize):
        k1, k2, k3, k4, k5, k6 = jax.random.split(key, 6)
        x = jax.random.normal(k1, (N, Cin, H, W), dtype=jnp.float32)
        conv_w = jax.random.normal(k2, (Cout, Cin, ksize, ksize),
                                   dtype=jnp.float32) * 0.1
        gamma = 1.0 + 0.1 * jax.random.normal(k3, (Cout,), dtype=jnp.float32)
        beta = 0.1 * jax.random.normal(k4, (Cout,), dtype=jnp.float32)
        run_mean = 0.1 * jax.random.normal(k5, (Cout,), dtype=jnp.float32)
        run_var = jnp.abs(jax.random.normal(k6, (Cout,), dtype=jnp.float32)) + 0.5
        return x, conv_w, gamma, beta, run_mean, run_var

    ka, kb, kc, kd = jax.random.split(key, 4)

    cases = [
        # (N, Cin, H, W, Cout, ksize, stride)
        (ka, 2, 4, 16, 16, 8, 3, 1),    # stem-like, small Cin -> width-tap-packed path
        (kb, 2, 4, 16, 16, 16, 3, 2),   # downsampling conv -> space-to-depth + packed path
        (kc, 1, 64, 16, 16, 32, 3, 1),  # large Cin -> generic per-tap (hoisted slab) path
        (kd, 2, 32, 16, 16, 64, 1, 1),  # 1x1 conv (common BaseConv use) -> single-dot path
    ]

    for (kk, N, Cin, H, W, Cout, ksize, stride) in cases:
        args = make_case(kk, N, Cin, H, W, Cout, ksize)
        out = base_conv_forward(*args, ksize=ksize, stride=stride)
        out = jax.block_until_ready(out)
        ref = base_conv_reference(*args, ksize, stride)
        np.testing.assert_allclose(np.asarray(out), np.asarray(ref),
                                   rtol=1e-3, atol=1e-3)

    print("KERNEL_OK")
</pallas_src>

<mosaic_0001>
module attributes {stable_mosaic.version = 11 : i64} {
  func.func @_conv_bn_act_kernel(%arg0: i32, %arg1: i32, %arg2: i32, %arg3: memref<1x18x16x128xbf16, #tpu.memory_space<vmem>>, %arg4: memref<3x128x128xbf16, #tpu.memory_space<vmem>>, %arg5: memref<1x128xf32, #tpu.memory_space<vmem>>, %arg6: memref<1x16x16x128xf32, #tpu.memory_space<vmem>>) attributes {dimension_semantics = [#tpu.dimension_semantics<parallel>, #tpu.dimension_semantics<parallel>, #tpu.dimension_semantics<parallel>], iteration_bounds = array<i64: 2, 1, 1>, scalar_prefetch = 0 : i64, scratch_operands = 0 : i64, tpu.core_type = #tpu.core_type<tc>, window_params = [{transform_indices = @transform_0, window_bounds = array<i64: 1, 18, 16, 128>}, {transform_indices = @transform_1, window_bounds = array<i64: 3, 128, 128>}, {transform_indices = @transform_2, window_bounds = array<i64: 1, 128>}, {transform_indices = @transform_3, window_bounds = array<i64: 1, 16, 16, 128>}]} {
    %c16_i32 = arith.constant 16 : i32
    %0 = arith.muli %arg2, %c16_i32 : i32
    %1 = tpu.assume_multiple %0, 8 : i32
    %c0_i32 = arith.constant 0 : i32
    %2 = arith.addi %1, %c0_i32 : i32
    %c0 = arith.constant 0 : index
    %3 = arith.index_cast %2 : i32 to index
    %c0_0 = arith.constant 0 : index
    %c0_1 = arith.constant 0 : index
    %4 = vector.load %arg3[%c0, %3, %c0_0, %c0_1] : memref<1x18x16x128xbf16, #tpu.memory_space<vmem>>, vector<1x16x16x128xbf16>
    %5 = vector.shape_cast %4 : vector<1x16x16x128xbf16> to vector<256x128xbf16>
    %c0_2 = arith.constant 0 : index
    %c0_3 = arith.constant 0 : index
    %c0_4 = arith.constant 0 : index
    %6 = vector.load %arg4[%c0_2, %c0_3, %c0_4] : memref<3x128x128xbf16, #tpu.memory_space<vmem>>, vector<1x128x128xbf16>
    %7 = vector.shape_cast %6 : vector<1x128x128xbf16> to vector<128x128xbf16>
    %cst = arith.constant dense<0.000000e+00> : vector<256x128xf32>
    %8 = tpu.matmul %5, %7, %cst {dimension_numbers = #tpu.dot_dimension_numbers<[1], [0], [0], [1], [0, 0, 1, 1], [], []>} : vector<256x128xbf16>, vector<128x128xbf16>, vector<256x128xf32> -> vector<256x128xf32>
    %c1_i32 = arith.constant 1 : i32
    %9 = arith.addi %1, %c1_i32 : i32
    %c0_5 = arith.constant 0 : index
    %10 = arith.index_cast %9 : i32 to index
    %c0_6 = arith.constant 0 : index
    %c0_7 = arith.constant 0 : index
    %11 = vector.load %arg3[%c0_5, %10, %c0_6, %c0_7] : memref<1x18x16x128xbf16, #tpu.memory_space<vmem>>, vector<1x16x16x128xbf16>
    %12 = vector.shape_cast %11 : vector<1x16x16x128xbf16> to vector<256x128xbf16>
    %c1 = arith.constant 1 : index
    %c0_8 = arith.constant 0 : index
    %c0_9 = arith.constant 0 : index
    %13 = vector.load %arg4[%c1, %c0_8, %c0_9] : memref<3x128x128xbf16, #tpu.memory_space<vmem>>, vector<1x128x128xbf16>
    %14 = vector.shape_cast %13 : vector<1x128x128xbf16> to vector<128x128xbf16>
    %cst_10 = arith.constant dense<0.000000e+00> : vector<256x128xf32>
    %15 = tpu.matmul %12, %14, %cst_10 {dimension_numbers = #tpu.dot_dimension_numbers<[1], [0], [0], [1], [0, 0, 1, 1], [], []>} : vector<256x128xbf16>, vector<128x128xbf16>, vector<256x128xf32> -> vector<256x128xf32>
    %16 = arith.addf %8, %15 : vector<256x128xf32>
    %c2_i32 = arith.constant 2 : i32
    %17 = arith.addi %1, %c2_i32 : i32
    %c0_11 = arith.constant 0 : index
    %18 = arith.index_cast %17 : i32 to index
    %c0_12 = arith.constant 0 : index
    %c0_13 = arith.constant 0 : index
    %19 = vector.load %arg3[%c0_11, %18, %c0_12, %c0_13] : memref<1x18x16x128xbf16, #tpu.memory_space<vmem>>, vector<1x16x16x128xbf16>
    %20 = vector.shape_cast %19 : vector<1x16x16x128xbf16> to vector<256x128xbf16>
    %c2 = arith.constant 2 : index
    %c0_14 = arith.constant 0 : index
    %c0_15 = arith.constant 0 : index
    %21 = vector.load %arg4[%c2, %c0_14, %c0_15] : memref<3x128x128xbf16, #tpu.memory_space<vmem>>, vector<1x128x128xbf16>
    %22 = vector.shape_cast %21 : vector<1x128x128xbf16> to vector<128x128xbf16>
    %cst_16 = arith.constant dense<0.000000e+00> : vector<256x128xf32>
    %23 = tpu.matmul %20, %22, %cst_16 {dimension_numbers = #tpu.dot_dimension_numbers<[1], [0], [0], [1], [0, 0, 1, 1], [], []>} : vector<256x128xbf16>, vector<128x128xbf16>, vector<256x128xf32> -> vector<256x128xf32>
    %24 = arith.addf %16, %23 : vector<256x128xf32>
    %c0_17 = arith.constant 0 : index
    %c0_18 = arith.constant 0 : index
    %25 = vector.load %arg5[%c0_17, %c0_18] : memref<1x128xf32, #tpu.memory_space<vmem>>, vector<1x128xf32>
    %26 = vector.broadcast %25 : vector<1x128xf32> to vector<256x128xf32>
    %27 = arith.addf %24, %26 : vector<256x128xf32>
    %28 = arith.negf %27 : vector<256x128xf32>
    %29 = math.exp %28 : vector<256x128xf32>
    %cst_19 = arith.constant 1.000000e+00 : f32
    %30 = vector.broadcast %cst_19 : f32 to vector<256x128xf32>
    %31 = arith.addf %30, %29 : vector<256x128xf32>
    %32 = arith.divf %30, %31 : vector<256x128xf32>
    %33 = arith.mulf %27, %32 : vector<256x128xf32>
    %34 = vector.shape_cast %33 : vector<256x128xf32> to vector<1x16x16x128xf32>
    %c0_20 = arith.constant 0 : index
    %c0_21 = arith.constant 0 : index
    %c0_22 = arith.constant 0 : index
    %c0_23 = arith.constant 0 : index
    %35 = vector.load %arg6[%c0_20, %c0_21, %c0_22, %c0_23] : memref<1x16x16x128xf32, #tpu.memory_space<vmem>>, vector<1x16x16x128xf32>
    tpu.vector_store %arg6[%c0_20, %c0_21, %c0_22, %c0_23], %34 {strides = array<i32>} : memref<1x16x16x128xf32, #tpu.memory_space<vmem>>, vector<1x16x16x128xf32>,
    return
  }
  func.func @transform_0(%arg0: i32, %arg1: i32, %arg2: i32) -> (i32, i32, i32, i32) {
    %c0_i32 = arith.constant 0 : i32
    %c0_i32_0 = arith.constant 0 : i32
    %c0_i32_1 = arith.constant 0 : i32
    %c0_i32_2 = arith.constant 0 : i32
    return %arg0, %c0_i32, %c0_i32_0, %c0_i32_1 : i32, i32, i32, i32
  }
  func.func @transform_1(%arg0: i32, %arg1: i32, %arg2: i32) -> (i32, i32, i32) {
    %c0_i32 = arith.constant 0 : i32
    %c0_i32_0 = arith.constant 0 : i32
    %c0_i32_1 = arith.constant 0 : i32
    return %c0_i32, %c0_i32_0, %arg1 : i32, i32, i32
  }
  func.func @transform_2(%arg0: i32, %arg1: i32, %arg2: i32) -> (i32, i32) {
    %c0_i32 = arith.constant 0 : i32
    %c0_i32_0 = arith.constant 0 : i32
    return %c0_i32, %arg1 : i32, i32
  }
  func.func @transform_3(%arg0: i32, %arg1: i32, %arg2: i32) -> (i32, i32, i32, i32) {
    %c0_i32 = arith.constant 0 : i32
    %c0_i32_0 = arith.constant 0 : i32
    return %arg0, %arg2, %c0_i32, %arg1 : i32, i32, i32, i32
  }
}

</mosaic_0001>

<llo_original>
// kernel: base_conv_forward.1
$region0: #{base_conv_forward.1}
  #allocation0 [shape = 'u32[]', space=smem, size = 0x4, offset = 0x4, fixed_abs, tag = 'smem constant byte address 0x4 - core index']
  #allocation1 [shape = 'u32[72,128]{1,0:T(1,128)}', space=vmem, size = 0x9000, scoped, tag = 'internal scratch']
  %s0 = inlined_call_operand.vmem [shape: bf16[2,18,16,128], index: 0, kind: input, shape index: {}]
  %s1 = inlined_call_operand.vmem [shape: bf16[3,128,128], index: 1, kind: input, shape index: {}]
  %s2 = inlined_call_operand.vmem [shape: f32[1,128], index: 2, kind: input, shape index: {}]
  %s3 = inlined_call_operand.vmem [shape: f32[2,16,16,128], index: 3, kind: output, shape index: {}]
  %s4 = sld [smem:[#allocation0]]
  $region45: #{base_conv_forward.1} parent=0
    _
  %s6 = ssub.s32 1, %s4
  %s7 = scalar_select 0, %s6, %s4
  loop: start=0, step=1, limit=4
  $region2: #{base_conv_forward.1} parent=0 // loop_pre_header
    _
  $region3: #{base_conv_forward.1} parent=0 // loop_header
    %s9 = sphi 0, %s13
    %p10 = scmp.ge.s32.totalorder %s9, 4
    %s16 = sphi 0, %s35
    %s17 = sphi 0, %s31
    %s18 = sphi 0, %s27
    %s19 = sphi 0, %s16
    %s20 = sphi 0, %s17
    %s21 = sphi 0, %s18
    %s22 = sphi 0, %s19
    %s23 = sphi 0, %s20
    %s24 = sphi 0, %s21
    %s38 = sphi 0, %s40
    %s41 = sphi 0, %s38
    %s42 = sphi 0, %s41
    %s58 = sphi 0, %s42
    %s64 = sphi 0, %s66
    %s67 = sphi 0, %s64
    %s68 = sphi 0, %s67
    %s84 = sphi 0, %s68
    %s90 = sphi 0, %s92
    %s93 = sphi 0, %s90
    %s94 = sphi 0, %s93
    %s110 = sphi 0, %s94
    %s120 = sphi 0, %s122
    %s123 = sphi 0, %s120
    %s124 = sphi 0, %s123
    %s140 = sphi 0, %s124
  $region4: #{base_conv_forward.1} parent=0 // loop_header_branch
    %12 = sbr.rel (%p10) target = $region8
  $region5: #{base_conv_forward.1} parent=0 // loop_body
    %s14 = ssub.s32 %s9, 1
    %s15 = ssub.s32 %s9, 2
    %s25 = sadd.s32 1, %s18
    %p26 = scmp.ge.s32.totalorder %s25, 1
    %s27 = scalar_select %p26, 0, %s25
    %s28 = sadd.s32 1, %s17
    %s29 = scalar_select %p26, %s28, %s17
    %p30 = scmp.ge.s32.totalorder %s29, 1
    %s31 = scalar_select %p30, 0, %s29
    %s32 = sadd.s32 1, %s16
    %s33 = scalar_select %p30, %s32, %s16
    %p34 = scmp.ge.s32.totalorder %s33, 2
    %s35 = scalar_select %p34, 0, %s33
    %s36 = ssub.s32 %s16, %s35
    %p37 = scmp.eq.s32.totalorder %s36, 0
    %s39 = sadd.s32 %s38, 1
    %s40 = scalar_select %p37, %s38, %s39
    %p43 = pneg %p37
    %p44 = scmp.eq.s32.totalorder %s9, 1
    %p45 = por %p43, %p44
    %p46 = scmp.ne.s32.totalorder %s38, %s41
    %p47 = scmp.eq.s32.totalorder %s9, 0
    %p48 = por %p46, %p47
    %p49 = scmp.ne.s32.totalorder %s38, %s41
    %p50 = scmp.eq.s32.totalorder %s14, 1
    %p51 = por %p49, %p50
    %p52 = scmp.ne.s32.totalorder %s41, %s42
    %p53 = scmp.eq.s32.totalorder %s14, 0
    %p54 = por %p52, %p53
    %p55 = scmp.ne.s32.totalorder %s41, %s42
    %p56 = scmp.eq.s32.totalorder %s15, 1
    %p57 = por %p55, %p56
    %p59 = scmp.ne.s32.totalorder %s42, %s58
    %p60 = scmp.eq.s32.totalorder %s15, 0
    %p61 = por %p59, %p60
    %s62 = ssub.s32 %s17, %s31
    %p63 = scmp.eq.s32.totalorder %s62, 0
    %s65 = sadd.s32 %s64, 1
    %s66 = scalar_select %p63, %s64, %s65
    %p69 = pneg %p63
    %p70 = scmp.eq.s32.totalorder %s9, 1
    %p71 = por %p69, %p70
    %p72 = scmp.ne.s32.totalorder %s64, %s67
    %p73 = scmp.eq.s32.totalorder %s9, 0
    %p74 = por %p72, %p73
    %p75 = scmp.ne.s32.totalorder %s64, %s67
    %p76 = scmp.eq.s32.totalorder %s14, 1
    %p77 = por %p75, %p76
    %p78 = scmp.ne.s32.totalorder %s67, %s68
    %p79 = scmp.eq.s32.totalorder %s14, 0
    %p80 = por %p78, %p79
    %p81 = scmp.ne.s32.totalorder %s67, %s68
    %p82 = scmp.eq.s32.totalorder %s15, 1
    %p83 = por %p81, %p82
    %p85 = scmp.ne.s32.totalorder %s68, %s84
    %p86 = scmp.eq.s32.totalorder %s15, 0
    %p87 = por %p85, %p86
    %s88 = ssub.s32 %s17, %s31
    %p89 = scmp.eq.s32.totalorder %s88, 0
    %s91 = sadd.s32 %s90, 1
    %s92 = scalar_select %p89, %s90, %s91
    %p95 = pneg %p89
    %p96 = scmp.eq.s32.totalorder %s9, 1
    %p97 = por %p95, %p96
    %p98 = scmp.ne.s32.totalorder %s90, %s93
    %p99 = scmp.eq.s32.totalorder %s9, 0
    %p100 = por %p98, %p99
    %p101 = scmp.ne.s32.totalorder %s90, %s93
    %p102 = scmp.eq.s32.totalorder %s14, 1
    %p103 = por %p101, %p102
    %p104 = scmp.ne.s32.totalorder %s93, %s94
    %p105 = scmp.eq.s32.totalorder %s14, 0
    %p106 = por %p104, %p105
    %p107 = scmp.ne.s32.totalorder %s93, %s94
    %p108 = scmp.eq.s32.totalorder %s15, 1
    %p109 = por %p107, %p108
    %p111 = scmp.ne.s32.totalorder %s94, %s110
    %p112 = scmp.eq.s32.totalorder %s15, 0
    %p113 = por %p111, %p112
    %s114 = ssub.s32 %s16, %s35
    %s115 = ssub.s32 %s18, %s27
    %s116 = sor.u32 %s114, %s115
    %s117 = ssub.s32 %s17, %s31
    %s118 = sor.u32 %s116, %s117
    %p119 = scmp.eq.s32.totalorder %s118, 0
    %s121 = sadd.s32 %s120, 1
    %s122 = scalar_select %p119, %s120, %s121
    %p125 = pneg %p119
    %p126 = scmp.eq.s32.totalorder %s9, 1
    %p127 = por %p125, %p126
    %p128 = scmp.ne.s32.totalorder %s120, %s123
    %p129 = scmp.eq.s32.totalorder %s9, 0
    %p130 = por %p128, %p129
    %p131 = scmp.ne.s32.totalorder %s120, %s123
    %p132 = scmp.eq.s32.totalorder %s14, 1
    %p133 = por %p131, %p132
    %p134 = scmp.ne.s32.totalorder %s123, %s124
    %p135 = scmp.eq.s32.totalorder %s14, 0
    %p136 = por %p134, %p135
    %p137 = scmp.ne.s32.totalorder %s123, %s124
    %p138 = scmp.eq.s32.totalorder %s15, 1
    %p139 = por %p137, %p138
    %p141 = scmp.ne.s32.totalorder %s124, %s140
    %p142 = scmp.eq.s32.totalorder %s15, 0
    %p143 = por %p141, %p142
    %p144 = scmp.le.s32.totalorder 1, %s9
    %p145 = scmp.lt.s32.totalorder %s9, 3
    %p146 = pnand %p144, %p145
    %p147 = pneg %p146
    // Predicated region
    $region9: #{base_conv_forward.1} parent=5 // pred_check
      _
    $region10: #{base_conv_forward.1} parent=5 // pred_check_branch
      %149 = sbr.rel (%p146) target = $region12
    $region11: #{base_conv_forward.1} parent=5 // pred_region
      %s150 = ssub.s32 %s9, 1
      // Predicated region
      $region13: #{base_conv_forward.1} parent=11 // pred_check
        %p151 = pneg %p80
      $region14: #{base_conv_forward.1} parent=11 // pred_check_branch
        %153 = sbr.rel (%p151) target = $region16
      $region15: #{base_conv_forward.1} parent=11 // pred_region
        %p154 = scmp.lt.s32.totalorder %s20, 0
        %s155 = scalar_select %p154, %s20, 0
        %s156 = smul.addr %s155, 4
        %s157 = scalar_lea.vmem %s1, %s156
      $region16: #{base_conv_forward.1} parent=11 // pred_fallthru
        _
      // Predicated region
      $region17: #{base_conv_forward.1} parent=11 // pred_check
        %p158 = pneg %p106
      $region18: #{base_conv_forward.1} parent=11 // pred_check_branch
        %160 = sbr.rel (%p158) target = $region20
      $region19: #{base_conv_forward.1} parent=11 // pred_region
        %p161 = scmp.lt.s32.totalorder %s20, 0
        %s162 = scalar_select %p161, %s20, 0
        %s163 = scalar_lea.vmem %s2, %s162
      $region20: #{base_conv_forward.1} parent=11 // pred_fallthru
        _
    $region12: #{base_conv_forward.1} parent=5 // pred_fallthru
      _
    %p164 = scmp.lt.s32.totalorder %s9, 2
    // Predicated region
    $region21: #{base_conv_forward.1} parent=5 // pred_check
      %p165 = pneg %p164
    $region22: #{base_conv_forward.1} parent=5 // pred_check_branch
      %167 = sbr.rel (%p165) target = $region24
    $region23: #{base_conv_forward.1} parent=5 // pred_region
      // Predicated region
      $region25: #{base_conv_forward.1} parent=23 // pred_check
        %p168 = pneg %p48
      $region26: #{base_conv_forward.1} parent=23 // pred_check_branch
        %170 = sbr.rel (%p168) target = $region28
      $region27: #{base_conv_forward.1} parent=23 // pred_region
        %p171 = scmp.lt.s32.totalorder %s16, 1
        %s172 = scalar_select %p171, %s16, 1
        %s173 = smul.addr %s172, 36
        %s174 = smul.addr %s173, 4
        %s175 = scalar_lea.vmem %s0, %s174
      $region28: #{base_conv_forward.1} parent=23 // pred_fallthru
        _
    $region24: #{base_conv_forward.1} parent=5 // pred_fallthru
      _
    %p176 = scmp.le.s32.totalorder 1, %s9
    %p177 = scmp.lt.s32.totalorder %s9, 3
    %p178 = pnand %p176, %p177
    %p179 = pneg %p178
    // Predicated region
    $region29: #{base_conv_forward.1} parent=5 // pred_check
      _
    $region30: #{base_conv_forward.1} parent=5 // pred_check_branch
      %181 = sbr.rel (%p178) target = $region32
    $region31: #{base_conv_forward.1} parent=5 // pred_region
      %s182 = ssub.s32 %s9, 1
      %p183 = scmp.lt.s32.totalorder %s19, 1
      %s184 = scalar_select %p183, %s19, 1
      %s185 = smul.addr %s184, 36
      %s186 = smul.addr %s185, 4
      %s187 = scalar_lea.vmem %s0, %s186
      %p188 = pneg %p54
      %p189 = pneg %p51
      %p190 = scmp.lt.s32.totalorder %s20, 0
      %s191 = scalar_select %p190, %s20, 0
      %s192 = smul.addr %s191, 4
      %s193 = scalar_lea.vmem %s1, %s192
      %p194 = pneg %p80
      %p195 = pneg %p77
      %p196 = scmp.lt.s32.totalorder %s20, 0
      %s197 = scalar_select %p196, %s20, 0
      %s198 = scalar_lea.vmem %s2, %s197
      %p199 = pneg %p106
      %p200 = pneg %p103
      %p201 = pneg %p136
      %p202 = pneg %p133
      %s203 = smul.u32 16, %s21
      %p204 = scmp.lt.s32.totalorder %s19, 1
      %s205 = scalar_select %p204, %s19, 1
      %p206 = scmp.lt.s32.totalorder %s203, 15
      %s207 = scalar_select %p206, %s203, 15
      %p208 = scmp.lt.s32.totalorder %s20, 0
      %s209 = scalar_select %p208, %s20, 0
      %s210 = smul.addr %s207, 2
      %s211 = sadd.s32 %s209, %s210
      %s212 = smul.addr %s205, 32
      %s213 = sadd.s32 %s211, %s212
      %s214 = smul.addr %s213, 8
      %s215 = scalar_lea.vmem %s3, %s214
      %p216 = scmp.lt.s32.totalorder %s19, 1
      %s217 = scalar_select %p216, %s19, 1
      %s218 = smul.addr %s217, 36
      %s219 = smul.addr %s218, 4
      %s220 = scalar_lea.vmem %s0, %s219
      %p221 = scmp.lt.s32.totalorder %s20, 0
      %s222 = scalar_select %p221, %s20, 0
      %s223 = smul.addr %s222, 4
      %s224 = scalar_lea.vmem %s1, %s223
      %p225 = scmp.lt.s32.totalorder %s20, 0
      %s226 = scalar_select %p225, %s20, 0
      %s227 = scalar_lea.vmem %s2, %s226
      %s228 = smul.u32 16, %s21
      %p229 = scmp.lt.s32.totalorder %s19, 1
      %s230 = scalar_select %p229, %s19, 1
      %p231 = scmp.lt.s32.totalorder %s228, 15
      %s232 = scalar_select %p231, %s228, 15
      %p233 = scmp.lt.s32.totalorder %s20, 0
      %s234 = scalar_select %p233, %s20, 0
      %s235 = smul.addr %s232, 2
      %s236 = sadd.s32 %s234, %s235
      %s237 = smul.addr %s230, 32
      %s238 = sadd.s32 %s236, %s237
      %s239 = smul.addr %s238, 8
      %s240 = scalar_lea.vmem %s3, %s239
      %s241 = smul.u32 16, %s21
      %s242 = smul.u32 %s21, 16
      %s243 = smul.u32 %s242, 2
      %s244 = smul.addr %s243, 4
      %s245 = scalar_lea.vmem %s220, %s244
      %v246 = vld [vmem:[%s245] sm:$0xf]
      %v247 = vld [vmem:[%s245 + $0x4] sm:$0xf]
      %v248 = vld [vmem:[%s245 + $0x8] sm:$0xf]
      %v249 = vld [vmem:[%s245 + $0xc] sm:$0xf]
      %v250 = vld [vmem:[%s245 + $0x10] sm:$0xf]
      %v251 = vld [vmem:[%s245 + $0x14] sm:$0xf]
      %v252 = vld [vmem:[%s245 + $0x18] sm:$0xf]
      %v253 = vld [vmem:[%s245 + $0x1c] sm:$0xf]
      %v254 = vld [vmem:[%s245 + $0x20] sm:$0xf]
      %v255 = vld [vmem:[%s245 + $0x24] sm:$0xf]
      %v256 = vld [vmem:[%s245 + $0x28] sm:$0xf]
      %v257 = vld [vmem:[%s245 + $0x2c] sm:$0xf]
      %v258 = vld [vmem:[%s245 + $0x30] sm:$0xf]
      %v259 = vld [vmem:[%s245 + $0x34] sm:$0xf]
      %v260 = vld [vmem:[%s245 + $0x38] sm:$0xf]
      %v261 = vld [vmem:[%s245 + $0x3c] sm:$0xf]
      %v262 = vld [vmem:[%s245 + $0x40] sm:$0xf]
      %v263 = vld [vmem:[%s245 + $0x44] sm:$0xf]
      %v264 = vld [vmem:[%s245 + $0x48] sm:$0xf]
      %v265 = vld [vmem:[%s245 + $0x4c] sm:$0xf]
      %v266 = vld [vmem:[%s245 + $0x50] sm:$0xf]
      %v267 = vld [vmem:[%s245 + $0x54] sm:$0xf]
      %v268 = vld [vmem:[%s245 + $0x58] sm:$0xf]
      %v269 = vld [vmem:[%s245 + $0x5c] sm:$0xf]
      %v270 = vld [vmem:[%s245 + $0x60] sm:$0xf]
      %v271 = vld [vmem:[%s245 + $0x64] sm:$0xf]
      %v272 = vld [vmem:[%s245 + $0x68] sm:$0xf]
      %v273 = vld [vmem:[%s245 + $0x6c] sm:$0xf]
      %v274 = vld [vmem:[%s245 + $0x70] sm:$0xf]
      %v275 = vld [vmem:[%s245 + $0x74] sm:$0xf]
      %v276 = vld [vmem:[%s245 + $0x78] sm:$0xf]
      %v277 = vld [vmem:[%s245 + $0x7c] sm:$0xf]
      %v278 = vld [vmem:[%s224] sm:$0xf]
      %v279 = vld [vmem:[%s224 + $0x4] sm:$0xf]
      %v280 = vld [vmem:[%s224 + $0x8] sm:$0xf]
      %v281 = vld [vmem:[%s224 + $0xc] sm:$0xf]
      %v282 = vld [vmem:[%s224 + $0x10] sm:$0xf]
      %v283 = vld [vmem:[%s224 + $0x14] sm:$0xf]
      %v284 = vld [vmem:[%s224 + $0x18] sm:$0xf]
      %v285 = vld [vmem:[%s224 + $0x1c] sm:$0xf]
      %v286 = vld [vmem:[%s224 + $0x20] sm:$0xf]
      %v287 = vld [vmem:[%s224 + $0x24] sm:$0xf]
      %v288 = vld [vmem:[%s224 + $0x28] sm:$0xf]
      %v289 = vld [vmem:[%s224 + $0x2c] sm:$0xf]
      %v290 = vld [vmem:[%s224 + $0x30] sm:$0xf]
      %v291 = vld [vmem:[%s224 + $0x34] sm:$0xf]
      %v292 = vld [vmem:[%s224 + $0x38] sm:$0xf]
      %v293 = vld [vmem:[%s224 + $0x3c] sm:$0xf]
      %s294 = sadd.s32 %s242, 1
      %s295 = smul.u32 %s294, 2
      %s296 = smul.addr %s295, 4
      %s297 = scalar_lea.vmem %s220, %s296
      %v298 = vld [vmem:[%s297] sm:$0xf]
      %v299 = vld [vmem:[%s297 + $0x4] sm:$0xf]
      %v300 = vld [vmem:[%s297 + $0x8] sm:$0xf]
      %v301 = vld [vmem:[%s297 + $0xc] sm:$0xf]
      %v302 = vld [vmem:[%s297 + $0x10] sm:$0xf]
      %v303 = vld [vmem:[%s297 + $0x14] sm:$0xf]
      %v304 = vld [vmem:[%s297 + $0x18] sm:$0xf]
      %v305 = vld [vmem:[%s297 + $0x1c] sm:$0xf]
      %v306 = vld [vmem:[%s297 + $0x20] sm:$0xf]
      %v307 = vld [vmem:[%s297 + $0x24] sm:$0xf]
      %v308 = vld [vmem:[%s297 + $0x28] sm:$0xf]
      %v309 = vld [vmem:[%s297 + $0x2c] sm:$0xf]
      %v310 = vld [vmem:[%s297 + $0x30] sm:$0xf]
      %v311 = vld [vmem:[%s297 + $0x34] sm:$0xf]
      %v312 = vld [vmem:[%s297 + $0x38] sm:$0xf]
      %v313 = vld [vmem:[%s297 + $0x3c] sm:$0xf]
      %v314 = vld [vmem:[%s297 + $0x40] sm:$0xf]
      %v315 = vld [vmem:[%s297 + $0x44] sm:$0xf]
      %v316 = vld [vmem:[%s297 + $0x48] sm:$0xf]
      %v317 = vld [vmem:[%s297 + $0x4c] sm:$0xf]
      %v318 = vld [vmem:[%s297 + $0x50] sm:$0xf]
      %v319 = vld [vmem:[%s297 + $0x54] sm:$0xf]
      %v320 = vld [vmem:[%s297 + $0x58] sm:$0xf]
      %v321 = vld [vmem:[%s297 + $0x5c] sm:$0xf]
      %v322 = vld [vmem:[%s297 + $0x60] sm:$0xf]
      %v323 = vld [vmem:[%s297 + $0x64] sm:$0xf]
      %v324 = vld [vmem:[%s297 + $0x68] sm:$0xf]
      %v325 = vld [vmem:[%s297 + $0x6c] sm:$0xf]
      %v326 = vld [vmem:[%s297 + $0x70] sm:$0xf]
      %v327 = vld [vmem:[%s297 + $0x74] sm:$0xf]
      %v328 = vld [vmem:[%s297 + $0x78] sm:$0xf]
      %v329 = vld [vmem:[%s297 + $0x7c] sm:$0xf]
      %s330 = scalar_lea.vmem %s224, 64
      %v331 = vld [vmem:[%s330] sm:$0xf]
      %v332 = vld [vmem:[%s330 + $0x4] sm:$0xf]
      %v333 = vld [vmem:[%s330 + $0x8] sm:$0xf]
      %v334 = vld [vmem:[%s330 + $0xc] sm:$0xf]
      %v335 = vld [vmem:[%s330 + $0x10] sm:$0xf]
      %v336 = vld [vmem:[%s330 + $0x14] sm:$0xf]
      %v337 = vld [vmem:[%s330 + $0x18] sm:$0xf]
      %v338 = vld [vmem:[%s330 + $0x1c] sm:$0xf]
      %v339 = vld [vmem:[%s330 + $0x20] sm:$0xf]
      %v340 = vld [vmem:[%s330 + $0x24] sm:$0xf]
      %v341 = vld [vmem:[%s330 + $0x28] sm:$0xf]
      %v342 = vld [vmem:[%s330 + $0x2c] sm:$0xf]
      %v343 = vld [vmem:[%s330 + $0x30] sm:$0xf]
      %v344 = vld [vmem:[%s330 + $0x34] sm:$0xf]
      %v345 = vld [vmem:[%s330 + $0x38] sm:$0xf]
      %v346 = vld [vmem:[%s330 + $0x3c] sm:$0xf]
      %v379 = vunpack.c.l.b16 %v298
      %v380 = vunpack.c.l.b16 %v299
      %v381 = vunpack.c.l.b16 %v300
      %v382 = vunpack.c.l.b16 %v301
      %v383 = vunpack.c.l.b16 %v302
      %v384 = vunpack.c.l.b16 %v303
      %v385 = vunpack.c.l.b16 %v304
      %v386 = vunpack.c.l.b16 %v305
      %v387 = vunpack.c.l.b16 %v306
      %v388 = vunpack.c.l.b16 %v307
      %v389 = vunpack.c.l.b16 %v308
      %v390 = vunpack.c.l.b16 %v309
      %v391 = vunpack.c.l.b16 %v310
      %v392 = vunpack.c.l.b16 %v311
      %v393 = vunpack.c.l.b16 %v312
      %v394 = vunpack.c.l.b16 %v313
      %v395 = vunpack.c.l.b16 %v314
      %v396 = vunpack.c.l.b16 %v315
      %v397 = vunpack.c.l.b16 %v316
      %v398 = vunpack.c.l.b16 %v317
      %v399 = vunpack.c.l.b16 %v318
      %v400 = vunpack.c.l.b16 %v319
      %v401 = vunpack.c.l.b16 %v320
      %v402 = vunpack.c.l.b16 %v321
      %v403 = vunpack.c.l.b16 %v322
      %v404 = vunpack.c.l.b16 %v323
      %v405 = vunpack.c.l.b16 %v324
      %v406 = vunpack.c.l.b16 %v325
      %v407 = vunpack.c.l.b16 %v326
      %v408 = vunpack.c.l.b16 %v327
      %v409 = vunpack.c.l.b16 %v328
      %v410 = vunpack.c.l.b16 %v329
      %v411 = vpack.c.b16 %v380, %v379
      %v412 = vpack.c.b16 %v382, %v381
      %v413 = vpack.c.b16 %v384, %v383
      %v414 = vpack.c.b16 %v386, %v385
      %v415 = vpack.c.b16 %v388, %v387
      %v416 = vpack.c.b16 %v390, %v389
      %v417 = vpack.c.b16 %v392, %v391
      %v418 = vpack.c.b16 %v394, %v393
      %v419 = vpack.c.b16 %v396, %v395
      %v420 = vpack.c.b16 %v398, %v397
      %v421 = vpack.c.b16 %v400, %v399
      %v422 = vpack.c.b16 %v402, %v401
      %v423 = vpack.c.b16 %v404, %v403
      %v424 = vpack.c.b16 %v406, %v405
      %v425 = vpack.c.b16 %v408, %v407
      %v426 = vpack.c.b16 %v410, %v409
      %v459 = vunpack.c.l.b16 %v331
      %v460 = vunpack.c.l.b16 %v332
      %v461 = vunpack.c.l.b16 %v333
      %v462 = vunpack.c.l.b16 %v334
      %v463 = vunpack.c.l.b16 %v335
      %v464 = vunpack.c.l.b16 %v336
      %v465 = vunpack.c.l.b16 %v337
      %v466 = vunpack.c.l.b16 %v338
      %v467 = vunpack.c.l.b16 %v339
      %v468 = vunpack.c.l.b16 %v340
      %v469 = vunpack.c.l.b16 %v341
      %v470 = vunpack.c.l.b16 %v342
      %v471 = vunpack.c.l.b16 %v343
      %v472 = vunpack.c.l.b16 %v344
      %v473 = vunpack.c.l.b16 %v345
      %v474 = vunpack.c.l.b16 %v346
      %v475 = vpack.c.b16 %v460, %v459
      %v476 = vpack.c.b16 %v462, %v461
      %v477 = vpack.c.b16 %v464, %v463
      %v478 = vpack.c.b16 %v466, %v465
      %v479 = vpack.c.b16 %v468, %v467
      %v480 = vpack.c.b16 %v470, %v469
      %v481 = vpack.c.b16 %v472, %v471
      %v482 = vpack.c.b16 %v474, %v473
      %491 = vmatpush.bf16.msra.mxu0 %v482
      %492 = vmatpush.bf16.msra.mxu0 %v481
      %493 = vmatpush.bf16.msra.mxu0 %v480
      %494 = vmatpush.bf16.msra.mxu0 %v479
      %495 = vmatpush.bf16.msra.mxu0 %v478
      %496 = vmatpush.bf16.msra.mxu0 %v477
      %497 = vmatpush.bf16.msra.mxu0 %v476
      %498 = vmatpush.bf16.msra.mxu0 %v475
      %499 = vmatmul.bf16.gmra.mxu0 %v411
      %v500 = vpop.f32.mrf.mxu0
      %v501 = vadd.f32 0.0, %v500
      %v502 = vpop.f32.mrf.mxu0
      %v503 = vadd.f32 0.0, %v502
      %504 = vmatmul.bf16.gmra.mxu0 %v412
      %v505 = vpop.f32.mrf.mxu0
      %v506 = vadd.f32 0.0, %v505
      %v507 = vpop.f32.mrf.mxu0
      %v508 = vadd.f32 0.0, %v507
      %509 = vmatmul.bf16.gmra.mxu0 %v413
      %v510 = vpop.f32.mrf.mxu0
      %v511 = vadd.f32 0.0, %v510
      %v512 = vpop.f32.mrf.mxu0
      %v513 = vadd.f32 0.0, %v512
      %514 = vmatmul.bf16.gmra.mxu0 %v414
      %v515 = vpop.f32.mrf.mxu0
      %v516 = vadd.f32 0.0, %v515
      %v517 = vpop.f32.mrf.mxu0
      %v518 = vadd.f32 0.0, %v517
      %519 = vmatmul.bf16.gmra.mxu0 %v415
      %v520 = vpop.f32.mrf.mxu0
      %v521 = vadd.f32 0.0, %v520
      %v522 = vpop.f32.mrf.mxu0
      %v523 = vadd.f32 0.0, %v522
      %524 = vmatmul.bf16.gmra.mxu0 %v416
      %v525 = vpop.f32.mrf.mxu0
      %v526 = vadd.f32 0.0, %v525
      %v527 = vpop.f32.mrf.mxu0
      %v528 = vadd.f32 0.0, %v527
      %529 = vmatmul.bf16.gmra.mxu0 %v417
      %v530 = vpop.f32.mrf.mxu0
      %v531 = vadd.f32 0.0, %v530
      %v532 = vpop.f32.mrf.mxu0
      %v533 = vadd.f32 0.0, %v532
      %534 = vmatmul.bf16.gmra.mxu0 %v418
      %v535 = vpop.f32.mrf.mxu0
      %v536 = vadd.f32 0.0, %v535
      %v537 = vpop.f32.mrf.mxu0
      %v538 = vadd.f32 0.0, %v537
      %539 = vmatmul.bf16.gmra.mxu0 %v419
      %v540 = vpop.f32.mrf.mxu0
      %v541 = vadd.f32 0.0, %v540
      %v542 = vpop.f32.mrf.mxu0
      %v543 = vadd.f32 0.0, %v542
      %544 = vmatmul.bf16.gmra.mxu0 %v420
      %v545 = vpop.f32.mrf.mxu0
      %v546 = vadd.f32 0.0, %v545
      %v547 = vpop.f32.mrf.mxu0
      %v548 = vadd.f32 0.0, %v547
      %549 = vmatmul.bf16.gmra.mxu0 %v421
      %v550 = vpop.f32.mrf.mxu0
      %v551 = vadd.f32 0.0, %v550
      %v552 = vpop.f32.mrf.mxu0
      %v553 = vadd.f32 0.0, %v552
      %554 = vmatmul.bf16.gmra.mxu0 %v422
      %v555 = vpop.f32.mrf.mxu0
      %v556 = vadd.f32 0.0, %v555
      %v557 = vpop.f32.mrf.mxu0
      %v558 = vadd.f32 0.0, %v557
      %559 = vmatmul.bf16.gmra.mxu0 %v423
      %v560 = vpop.f32.mrf.mxu0
      %v561 = vadd.f32 0.0, %v560
      %v562 = vpop.f32.mrf.mxu0
      %v563 = vadd.f32 0.0, %v562
      %564 = vmatmul.bf16.gmra.mxu0 %v424
      %v565 = vpop.f32.mrf.mxu0
      %v566 = vadd.f32 0.0, %v565
      %v567 = vpop.f32.mrf.mxu0
      %v568 = vadd.f32 0.0, %v567
      %569 = vmatmul.bf16.gmra.mxu0 %v425
      %v570 = vpop.f32.mrf.mxu0
      %v571 = vadd.f32 0.0, %v570
      %v572 = vpop.f32.mrf.mxu0
      %v573 = vadd.f32 0.0, %v572
      %574 = vmatmul.bf16.gmra.mxu0 %v426
      %v575 = vpop.f32.mrf.mxu0
      %v576 = vadd.f32 0.0, %v575
      %v577 = vpop.f32.mrf.mxu0
      %v578 = vadd.f32 0.0, %v577
      %579 = vdwg.mxu0
      %v612 = vunpack.c.l.b16 %v246
      %v613 = vunpack.c.l.b16 %v247
      %v614 = vunpack.c.l.b16 %v248
      %v615 = vunpack.c.l.b16 %v249
      %v616 = vunpack.c.l.b16 %v250
      %v617 = vunpack.c.l.b16 %v251
      %v618 = vunpack.c.l.b16 %v252
      %v619 = vunpack.c.l.b16 %v253
      %v620 = vunpack.c.l.b16 %v254
      %v621 = vunpack.c.l.b16 %v255
      %v622 = vunpack.c.l.b16 %v256
      %v623 = vunpack.c.l.b16 %v257
      %v624 = vunpack.c.l.b16 %v258
      %v625 = vunpack.c.l.b16 %v259
      %v626 = vunpack.c.l.b16 %v260
      %v627 = vunpack.c.l.b16 %v261
      %v628 = vunpack.c.l.b16 %v262
      %v629 = vunpack.c.l.b16 %v263
      %v630 = vunpack.c.l.b16 %v264
      %v631 = vunpack.c.l.b16 %v265
      %v632 = vunpack.c.l.b16 %v266
      %v633 = vunpack.c.l.b16 %v267
      %v634 = vunpack.c.l.b16 %v268
      %v635 = vunpack.c.l.b16 %v269
      %v636 = vunpack.c.l.b16 %v270
      %v637 = vunpack.c.l.b16 %v271
      %v638 = vunpack.c.l.b16 %v272
      %v639 = vunpack.c.l.b16 %v273
      %v640 = vunpack.c.l.b16 %v274
      %v641 = vunpack.c.l.b16 %v275
      %v642 = vunpack.c.l.b16 %v276
      %v643 = vunpack.c.l.b16 %v277
      %v644 = vpack.c.b16 %v613, %v612
      %v645 = vpack.c.b16 %v615, %v614
      %v646 = vpack.c.b16 %v617, %v616
      %v647 = vpack.c.b16 %v619, %v618
      %v648 = vpack.c.b16 %v621, %v620
      %v649 = vpack.c.b16 %v623, %v622
      %v650 = vpack.c.b16 %v625, %v624
      %v651 = vpack.c.b16 %v627, %v626
      %v652 = vpack.c.b16 %v629, %v628
      %v653 = vpack.c.b16 %v631, %v630
      %v654 = vpack.c.b16 %v633, %v632
      %v655 = vpack.c.b16 %v635, %v634
      %v656 = vpack.c.b16 %v637, %v636
      %v657 = vpack.c.b16 %v639, %v638
      %v658 = vpack.c.b16 %v641, %v640
      %v659 = vpack.c.b16 %v643, %v642
      %v692 = vunpack.c.l.b16 %v278
      %v693 = vunpack.c.l.b16 %v279
      %v694 = vunpack.c.l.b16 %v280
      %v695 = vunpack.c.l.b16 %v281
      %v696 = vunpack.c.l.b16 %v282
      %v697 = vunpack.c.l.b16 %v283
      %v698 = vunpack.c.l.b16 %v284
      %v699 = vunpack.c.l.b16 %v285
      %v700 = vunpack.c.l.b16 %v286
      %v701 = vunpack.c.l.b16 %v287
      %v702 = vunpack.c.l.b16 %v288
      %v703 = vunpack.c.l.b16 %v289
      %v704 = vunpack.c.l.b16 %v290
      %v705 = vunpack.c.l.b16 %v291
      %v706 = vunpack.c.l.b16 %v292
      %v707 = vunpack.c.l.b16 %v293
      %v708 = vpack.c.b16 %v693, %v692
      %v709 = vpack.c.b16 %v695, %v694
      %v710 = vpack.c.b16 %v697, %v696
      %v711 = vpack.c.b16 %v699, %v698
      %v712 = vpack.c.b16 %v701, %v700
      %v713 = vpack.c.b16 %v703, %v702
      %v714 = vpack.c.b16 %v705, %v704
      %v715 = vpack.c.b16 %v707, %v706
      %724 = vmatpush.bf16.msra.mxu0 %v715
      %725 = vmatpush.bf16.msra.mxu0 %v714
      %726 = vmatpush.bf16.msra.mxu0 %v713
      %727 = vmatpush.bf16.msra.mxu0 %v712
      %728 = vmatpush.bf16.msra.mxu0 %v711
      %729 = vmatpush.bf16.msra.mxu0 %v710
      %730 = vmatpush.bf16.msra.mxu0 %v709
      %731 = vmatpush.bf16.msra.mxu0 %v708
      %732 = vmatmul.bf16.gmra.mxu0 %v644
      %v733 = vpop.f32.mrf.mxu0
      %v734 = vadd.f32 %v501, %v733
      %v735 = vpop.f32.mrf.mxu0
      %v736 = vadd.f32 %v503, %v735
      %737 = vmatmul.bf16.gmra.mxu0 %v645
      %v738 = vpop.f32.mrf.mxu0
      %v739 = vadd.f32 %v506, %v738
      %v740 = vpop.f32.mrf.mxu0
      %v741 = vadd.f32 %v508, %v740
      %742 = vmatmul.bf16.gmra.mxu0 %v646
      %v743 = vpop.f32.mrf.mxu0
      %v744 = vadd.f32 %v511, %v743
      %v745 = vpop.f32.mrf.mxu0
      %v746 = vadd.f32 %v513, %v745
      %747 = vmatmul.bf16.gmra.mxu0 %v647
      %v748 = vpop.f32.mrf.mxu0
      %v749 = vadd.f32 %v516, %v748
      %v750 = vpop.f32.mrf.mxu0
      %v751 = vadd.f32 %v518, %v750
      %752 = vmatmul.bf16.gmra.mxu0 %v648
      %v753 = vpop.f32.mrf.mxu0
      %v754 = vadd.f32 %v521, %v753
      %v755 = vpop.f32.mrf.mxu0
      %v756 = vadd.f32 %v523, %v755
      %757 = vmatmul.bf16.gmra.mxu0 %v649
      %v758 = vpop.f32.mrf.mxu0
      %v759 = vadd.f32 %v526, %v758
      %v760 = vpop.f32.mrf.mxu0
      %v761 = vadd.f32 %v528, %v760
      %762 = vmatmul.bf16.gmra.mxu0 %v650
      %v763 = vpop.f32.mrf.mxu0
      %v764 = vadd.f32 %v531, %v763
      %v765 = vpop.f32.mrf.mxu0
      %v766 = vadd.f32 %v533, %v765
      %767 = vmatmul.bf16.gmra.mxu0 %v651
      %v768 = vpop.f32.mrf.mxu0
      %v769 = vadd.f32 %v536, %v768
      %v770 = vpop.f32.mrf.mxu0
      %v771 = vadd.f32 %v538, %v770
      %772 = vmatmul.bf16.gmra.mxu0 %v652
      %v773 = vpop.f32.mrf.mxu0
      %v774 = vadd.f32 %v541, %v773
      %v775 = vpop.f32.mrf.mxu0
      %v776 = vadd.f32 %v543, %v775
      %777 = vmatmul.bf16.gmra.mxu0 %v653
      %v778 = vpop.f32.mrf.mxu0
      %v779 = vadd.f32 %v546, %v778
      %v780 = vpop.f32.mrf.mxu0
      %v781 = vadd.f32 %v548, %v780
      %782 = vmatmul.bf16.gmra.mxu0 %v654
      %v783 = vpop.f32.mrf.mxu0
      %v784 = vadd.f32 %v551, %v783
      %v785 = vpop.f32.mrf.mxu0
      %v786 = vadd.f32 %v553, %v785
      %787 = vmatmul.bf16.gmra.mxu0 %v655
      %v788 = vpop.f32.mrf.mxu0
      %v789 = vadd.f32 %v556, %v788
      %v790 = vpop.f32.mrf.mxu0
      %v791 = vadd.f32 %v558, %v790
      %792 = vmatmul.bf16.gmra.mxu0 %v656
      %v793 = vpop.f32.mrf.mxu0
      %v794 = vadd.f32 %v561, %v793
      %v795 = vpop.f32.mrf.mxu0
      %v796 = vadd.f32 %v563, %v795
      %797 = vmatmul.bf16.gmra.mxu0 %v657
      %v798 = vpop.f32.mrf.mxu0
      %v799 = vadd.f32 %v566, %v798
      %v800 = vpop.f32.mrf.mxu0
      %v801 = vadd.f32 %v568, %v800
      %802 = vmatmul.bf16.gmra.mxu0 %v658
      %v803 = vpop.f32.mrf.mxu0
      %v804 = vadd.f32 %v571, %v803
      %v805 = vpop.f32.mrf.mxu0
      %v806 = vadd.f32 %v573, %v805
      %807 = vmatmul.bf16.gmra.mxu0 %v659
      %v808 = vpop.f32.mrf.mxu0
      %v809 = vadd.f32 %v576, %v808
      %v810 = vpop.f32.mrf.mxu0
      %v811 = vadd.f32 %v578, %v810
      %812 = vdwg.mxu0
      %s813 = sadd.s32 %s242, 2
      %s814 = smul.u32 %s813, 2
      %s815 = smul.addr %s814, 4
      %s816 = scalar_lea.vmem %s220, %s815
      %v817 = vld [vmem:[%s816] sm:$0xf]
      %v818 = vld [vmem:[%s816 + $0x4] sm:$0xf]
      %v819 = vld [vmem:[%s816 + $0x8] sm:$0xf]
      %v820 = vld [vmem:[%s816 + $0xc] sm:$0xf]
      %v821 = vld [vmem:[%s816 + $0x10] sm:$0xf]
      %v822 = vld [vmem:[%s816 + $0x14] sm:$0xf]
      %v823 = vld [vmem:[%s816 + $0x18] sm:$0xf]
      %v824 = vld [vmem:[%s816 + $0x1c] sm:$0xf]
      %v825 = vld [vmem:[%s816 + $0x20] sm:$0xf]
      %v826 = vld [vmem:[%s816 + $0x24] sm:$0xf]
      %v827 = vld [vmem:[%s816 + $0x28] sm:$0xf]
      %v828 = vld [vmem:[%s816 + $0x2c] sm:$0xf]
      %v829 = vld [vmem:[%s816 + $0x30] sm:$0xf]
      %v830 = vld [vmem:[%s816 + $0x34] sm:$0xf]
      %v831 = vld [vmem:[%s816 + $0x38] sm:$0xf]
      %v832 = vld [vmem:[%s816 + $0x3c] sm:$0xf]
      %v833 = vld [vmem:[%s816 + $0x40] sm:$0xf]
      %v834 = vld [vmem:[%s816 + $0x44] sm:$0xf]
      %v835 = vld [vmem:[%s816 + $0x48] sm:$0xf]
      %v836 = vld [vmem:[%s816 + $0x4c] sm:$0xf]
      %v837 = vld [vmem:[%s816 + $0x50] sm:$0xf]
      %v838 = vld [vmem:[%s816 + $0x54] sm:$0xf]
      %v839 = vld [vmem:[%s816 + $0x58] sm:$0xf]
      %v840 = vld [vmem:[%s816 + $0x5c] sm:$0xf]
      %v841 = vld [vmem:[%s816 + $0x60] sm:$0xf]
      %v842 = vld [vmem:[%s816 + $0x64] sm:$0xf]
      %v843 = vld [vmem:[%s816 + $0x68] sm:$0xf]
      %v844 = vld [vmem:[%s816 + $0x6c] sm:$0xf]
      %v845 = vld [vmem:[%s816 + $0x70] sm:$0xf]
      %v846 = vld [vmem:[%s816 + $0x74] sm:$0xf]
      %v847 = vld [vmem:[%s816 + $0x78] sm:$0xf]
      %v848 = vld [vmem:[%s816 + $0x7c] sm:$0xf]
      %s849 = scalar_lea.vmem %s224, 128
      %v850 = vld [vmem:[%s849] sm:$0xf]
      %v851 = vld [vmem:[%s849 + $0x4] sm:$0xf]
      %v852 = vld [vmem:[%s849 + $0x8] sm:$0xf]
      %v853 = vld [vmem:[%s849 + $0xc] sm:$0xf]
      %v854 = vld [vmem:[%s849 + $0x10] sm:$0xf]
      %v855 = vld [vmem:[%s849 + $0x14] sm:$0xf]
      %v856 = vld [vmem:[%s849 + $0x18] sm:$0xf]
      %v857 = vld [vmem:[%s849 + $0x1c] sm:$0xf]
      %v858 = vld [vmem:[%s849 + $0x20] sm:$0xf]
      %v859 = vld [vmem:[%s849 + $0x24] sm:$0xf]
      %v860 = vld [vmem:[%s849 + $0x28] sm:$0xf]
      %v861 = vld [vmem:[%s849 + $0x2c] sm:$0xf]
      %v862 = vld [vmem:[%s849 + $0x30] sm:$0xf]
      %v863 = vld [vmem:[%s849 + $0x34] sm:$0xf]
      %v864 = vld [vmem:[%s849 + $0x38] sm:$0xf]
      %v865 = vld [vmem:[%s849 + $0x3c] sm:$0xf]
      %v898 = vunpack.c.l.b16 %v817
      %v899 = vunpack.c.l.b16 %v818
      %v900 = vunpack.c.l.b16 %v819
      %v901 = vunpack.c.l.b16 %v820
      %v902 = vunpack.c.l.b16 %v821
      %v903 = vunpack.c.l.b16 %v822
      %v904 = vunpack.c.l.b16 %v823
      %v905 = vunpack.c.l.b16 %v824
      %v906 = vunpack.c.l.b16 %v825
      %v907 = vunpack.c.l.b16 %v826
      %v908 = vunpack.c.l.b16 %v827
      %v909 = vunpack.c.l.b16 %v828
      %v910 = vunpack.c.l.b16 %v829
      %v911 = vunpack.c.l.b16 %v830
      %v912 = vunpack.c.l.b16 %v831
      %v913 = vunpack.c.l.b16 %v832
      %v914 = vunpack.c.l.b16 %v833
      %v915 = vunpack.c.l.b16 %v834
      %v916 = vunpack.c.l.b16 %v835
      %v917 = vunpack.c.l.b16 %v836
      %v918 = vunpack.c.l.b16 %v837
      %v919 = vunpack.c.l.b16 %v838
      %v920 = vunpack.c.l.b16 %v839
      %v921 = vunpack.c.l.b16 %v840
      %v922 = vunpack.c.l.b16 %v841
      %v923 = vunpack.c.l.b16 %v842
      %v924 = vunpack.c.l.b16 %v843
      %v925 = vunpack.c.l.b16 %v844
      %v926 = vunpack.c.l.b16 %v845
      %v927 = vunpack.c.l.b16 %v846
      %v928 = vunpack.c.l.b16 %v847
      %v929 = vunpack.c.l.b16 %v848
      %v930 = vpack.c.b16 %v899, %v898
      %v931 = vpack.c.b16 %v901, %v900
      %v932 = vpack.c.b16 %v903, %v902
      %v933 = vpack.c.b16 %v905, %v904
      %v934 = vpack.c.b16 %v907, %v906
      %v935 = vpack.c.b16 %v909, %v908
      %v936 = vpack.c.b16 %v911, %v910
      %v937 = vpack.c.b16 %v913, %v912
      %v938 = vpack.c.b16 %v915, %v914
      %v939 = vpack.c.b16 %v917, %v916
      %v940 = vpack.c.b16 %v919, %v918
      %v941 = vpack.c.b16 %v921, %v920
      %v942 = vpack.c.b16 %v923, %v922
      %v943 = vpack.c.b16 %v925, %v924
      %v944 = vpack.c.b16 %v927, %v926
      %v945 = vpack.c.b16 %v929, %v928
      %v978 = vunpack.c.l.b16 %v850
      %v979 = vunpack.c.l.b16 %v851
      %v980 = vunpack.c.l.b16 %v852
      %v981 = vunpack.c.l.b16 %v853
      %v982 = vunpack.c.l.b16 %v854
      %v983 = vunpack.c.l.b16 %v855
      %v984 = vunpack.c.l.b16 %v856
      %v985 = vunpack.c.l.b16 %v857
      %v986 = vunpack.c.l.b16 %v858
      %v987 = vunpack.c.l.b16 %v859
      %v988 = vunpack.c.l.b16 %v860
      %v989 = vunpack.c.l.b16 %v861
      %v990 = vunpack.c.l.b16 %v862
      %v991 = vunpack.c.l.b16 %v863
      %v992 = vunpack.c.l.b16 %v864
      %v993 = vunpack.c.l.b16 %v865
      %v994 = vpack.c.b16 %v979, %v978
      %v995 = vpack.c.b16 %v981, %v980
      %v996 = vpack.c.b16 %v983, %v982
      %v997 = vpack.c.b16 %v985, %v984
      %v998 = vpack.c.b16 %v987, %v986
      %v999 = vpack.c.b16 %v989, %v988
      %v1000 = vpack.c.b16 %v991, %v990
      %v1001 = vpack.c.b16 %v993, %v992
      %1010 = vmatpush.bf16.msra.mxu0 %v1001
      %1011 = vmatpush.bf16.msra.mxu0 %v1000
      %1012 = vmatpush.bf16.msra.mxu0 %v999
      %1013 = vmatpush.bf16.msra.mxu0 %v998
      %1014 = vmatpush.bf16.msra.mxu0 %v997
      %1015 = vmatpush.bf16.msra.mxu0 %v996
      %1016 = vmatpush.bf16.msra.mxu0 %v995
      %1017 = vmatpush.bf16.msra.mxu0 %v994
      %1018 = vmatmul.bf16.gmra.mxu0 %v930
      %v1019 = vpop.f32.mrf.mxu0
      %v1020 = vadd.f32 0.0, %v1019
      %v1021 = vpop.f32.mrf.mxu0
      %v1022 = vadd.f32 0.0, %v1021
      %1023 = vmatmul.bf16.gmra.mxu0 %v931
      %v1024 = vpop.f32.mrf.mxu0
      %v1025 = vadd.f32 0.0, %v1024
      %v1026 = vpop.f32.mrf.mxu0
      %v1027 = vadd.f32 0.0, %v1026
      %1028 = vmatmul.bf16.gmra.mxu0 %v932
      %v1029 = vpop.f32.mrf.mxu0
      %v1030 = vadd.f32 0.0, %v1029
      %v1031 = vpop.f32.mrf.mxu0
      %v1032 = vadd.f32 0.0, %v1031
      %1033 = vmatmul.bf16.gmra.mxu0 %v933
      %v1034 = vpop.f32.mrf.mxu0
      %v1035 = vadd.f32 0.0, %v1034
      %v1036 = vpop.f32.mrf.mxu0
      %v1037 = vadd.f32 0.0, %v1036
      %1038 = vmatmul.bf16.gmra.mxu0 %v934
      %v1039 = vpop.f32.mrf.mxu0
      %v1040 = vadd.f32 0.0, %v1039
      %v1041 = vpop.f32.mrf.mxu0
      %v1042 = vadd.f32 0.0, %v1041
      %1043 = vmatmul.bf16.gmra.mxu0 %v935
      %v1044 = vpop.f32.mrf.mxu0
      %v1045 = vadd.f32 0.0, %v1044
      %v1046 = vpop.f32.mrf.mxu0
      %v1047 = vadd.f32 0.0, %v1046
      %1048 = vmatmul.bf16.gmra.mxu0 %v936
      %v1049 = vpop.f32.mrf.mxu0
      %v1050 = vadd.f32 0.0, %v1049
      %v1051 = vpop.f32.mrf.mxu0
      %v1052 = vadd.f32 0.0, %v1051
      %1053 = vmatmul.bf16.gmra.mxu0 %v937
      %v1054 = vpop.f32.mrf.mxu0
      %v1055 = vadd.f32 0.0, %v1054
      %v1056 = vpop.f32.mrf.mxu0
      %v1057 = vadd.f32 0.0, %v1056
      %1058 = vmatmul.bf16.gmra.mxu0 %v938
      %v1059 = vpop.f32.mrf.mxu0
      %v1060 = vadd.f32 0.0, %v1059
      %v1061 = vpop.f32.mrf.mxu0
      %v1062 = vadd.f32 0.0, %v1061
      %1063 = vmatmul.bf16.gmra.mxu0 %v939
      %v1064 = vpop.f32.mrf.mxu0
      %v1065 = vadd.f32 0.0, %v1064
      %v1066 = vpop.f32.mrf.mxu0
      %v1067 = vadd.f32 0.0, %v1066
      %1068 = vmatmul.bf16.gmra.mxu0 %v940
      %v1069 = vpop.f32.mrf.mxu0
      %v1070 = vadd.f32 0.0, %v1069
      %v1071 = vpop.f32.mrf.mxu0
      %v1072 = vadd.f32 0.0, %v1071
      %1073 = vmatmul.bf16.gmra.mxu0 %v941
      %v1074 = vpop.f32.mrf.mxu0
      %v1075 = vadd.f32 0.0, %v1074
      %v1076 = vpop.f32.mrf.mxu0
      %v1077 = vadd.f32 0.0, %v1076
      %1078 = vmatmul.bf16.gmra.mxu0 %v942
      %v1079 = vpop.f32.mrf.mxu0
      %v1080 = vadd.f32 0.0, %v1079
      %v1081 = vpop.f32.mrf.mxu0
      %v1082 = vadd.f32 0.0, %v1081
      %1083 = vmatmul.bf16.gmra.mxu0 %v943
      %v1084 = vpop.f32.mrf.mxu0
      %v1085 = vadd.f32 0.0, %v1084
      %v1086 = vpop.f32.mrf.mxu0
      %v1087 = vadd.f32 0.0, %v1086
      %1088 = vmatmul.bf16.gmra.mxu0 %v944
      %v1089 = vpop.f32.mrf.mxu0
      %v1090 = vadd.f32 0.0, %v1089
      %v1091 = vpop.f32.mrf.mxu0
      %v1092 = vadd.f32 0.0, %v1091
      %1093 = vmatmul.bf16.gmra.mxu0 %v945
      %v1094 = vpop.f32.mrf.mxu0
      %v1095 = vadd.f32 0.0, %v1094
      %v1096 = vpop.f32.mrf.mxu0
      %v1097 = vadd.f32 0.0, %v1096
      %1098 = vdwg.mxu0
      %v1099 = vadd.f32 %v734, %v1020
      %v1100 = vadd.f32 %v736, %v1022
      %v1101 = vadd.f32 %v739, %v1025
      %v1102 = vadd.f32 %v741, %v1027
      %v1103 = vadd.f32 %v744, %v1030
      %v1104 = vadd.f32 %v746, %v1032
      %v1105 = vadd.f32 %v749, %v1035
      %v1106 = vadd.f32 %v751, %v1037
      %v1107 = vadd.f32 %v754, %v1040
      %v1108 = vadd.f32 %v756, %v1042
      %v1109 = vadd.f32 %v759, %v1045
      %v1110 = vadd.f32 %v761, %v1047
      %v1111 = vadd.f32 %v764, %v1050
      %v1112 = vadd.f32 %v766, %v1052
      %v1113 = vadd.f32 %v769, %v1055
      %v1114 = vadd.f32 %v771, %v1057
      %v1115 = vadd.f32 %v774, %v1060
      %v1116 = vadd.f32 %v776, %v1062
      %v1117 = vadd.f32 %v779, %v1065
      %v1118 = vadd.f32 %v781, %v1067
      %v1119 = vadd.f32 %v784, %v1070
      %v1120 = vadd.f32 %v786, %v1072
      %v1121 = vadd.f32 %v789, %v1075
      %v1122 = vadd.f32 %v791, %v1077
      %v1123 = vadd.f32 %v794, %v1080
      %v1124 = vadd.f32 %v796, %v1082
      %v1125 = vadd.f32 %v799, %v1085
      %v1126 = vadd.f32 %v801, %v1087
      %v1127 = vadd.f32 %v804, %v1090
      %v1128 = vadd.f32 %v806, %v1092
      %v1129 = vadd.f32 %v809, %v1095
      %v1130 = vadd.f32 %v811, %v1097
      %v1131 = vld [vmem:[%s227] sm:$0x1]
      %v1133 = vperm.slane %v1131, 0
      %v1135 = vadd.f32 %v1099, %v1133
      %v1136 = vadd.f32 %v1100, %v1133
      %v1137 = vadd.f32 %v1101, %v1133
      %v1138 = vadd.f32 %v1102, %v1133
      %v1139 = vadd.f32 %v1103, %v1133
      %v1140 = vadd.f32 %v1104, %v1133
      %v1141 = vadd.f32 %v1105, %v1133
      %v1142 = vadd.f32 %v1106, %v1133
      %v1143 = vadd.f32 %v1107, %v1133
      %v1144 = vadd.f32 %v1108, %v1133
      %v1145 = vadd.f32 %v1109, %v1133
      %v1146 = vadd.f32 %v1110, %v1133
      %v1147 = vadd.f32 %v1111, %v1133
      %v1148 = vadd.f32 %v1112, %v1133
      %v1149 = vadd.f32 %v1113, %v1133
      %v1150 = vadd.f32 %v1114, %v1133
      %v1151 = vadd.f32 %v1115, %v1133
      %v1152 = vadd.f32 %v1116, %v1133
      %v1153 = vadd.f32 %v1117, %v1133
      %v1154 = vadd.f32 %v1118, %v1133
      %v1155 = vadd.f32 %v1119, %v1133
      %v1156 = vadd.f32 %v1120, %v1133
      %v1157 = vadd.f32 %v1121, %v1133
      %v1158 = vadd.f32 %v1122, %v1133
      %v1159 = vadd.f32 %v1123, %v1133
      %v1160 = vadd.f32 %v1124, %v1133
      %v1161 = vadd.f32 %v1125, %v1133
      %v1162 = vadd.f32 %v1126, %v1133
      %v1163 = vadd.f32 %v1127, %v1133
      %v1164 = vadd.f32 %v1128, %v1133
      %v1165 = vadd.f32 %v1129, %v1133
      %v1166 = vadd.f32 %v1130, %v1133
      %v1167 = vxor.u32 %v1135, 2147483648
      %v1168 = vxor.u32 %v1136, 2147483648
      %v1169 = vxor.u32 %v1137, 2147483648
      %v1170 = vxor.u32 %v1138, 2147483648
      %v1171 = vxor.u32 %v1139, 2147483648
      %v1172 = vxor.u32 %v1140, 2147483648
      %v1173 = vxor.u32 %v1141, 2147483648
      %v1174 = vxor.u32 %v1142, 2147483648
      %v1175 = vxor.u32 %v1143, 2147483648
      %v1176 = vxor.u32 %v1144, 2147483648
      %v1177 = vxor.u32 %v1145, 2147483648
      %v1178 = vxor.u32 %v1146, 2147483648
      %v1179 = vxor.u32 %v1147, 2147483648
      %v1180 = vxor.u32 %v1148, 2147483648
      %v1181 = vxor.u32 %v1149, 2147483648
      %v1182 = vxor.u32 %v1150, 2147483648
      %v1183 = vxor.u32 %v1151, 2147483648
      %v1184 = vxor.u32 %v1152, 2147483648
      %v1185 = vxor.u32 %v1153, 2147483648
      %v1186 = vxor.u32 %v1154, 2147483648
      %v1187 = vxor.u32 %v1155, 2147483648
      %v1188 = vxor.u32 %v1156, 2147483648
      %v1189 = vxor.u32 %v1157, 2147483648
      %v1190 = vxor.u32 %v1158, 2147483648
      %v1191 = vxor.u32 %v1159, 2147483648
      %v1192 = vxor.u32 %v1160, 2147483648
      %v1193 = vxor.u32 %v1161, 2147483648
      %v1194 = vxor.u32 %v1162, 2147483648
      %v1195 = vxor.u32 %v1163, 2147483648
      %v1196 = vxor.u32 %v1164, 2147483648
      %v1197 = vxor.u32 %v1165, 2147483648
      %v1198 = vxor.u32 %v1166, 2147483648
      %v1199 = vmul.f32 %v1167, 1.442695
      %v1200 = vpow.pop %v1199
      %v1201 = vmul.f32 %v1168, 1.442695
      %v1202 = vpow.pop %v1201
      %v1203 = vmul.f32 %v1169, 1.442695
      %v1204 = vpow.pop %v1203
      %v1205 = vmul.f32 %v1170, 1.442695
      %v1206 = vpow.pop %v1205
      %v1207 = vmul.f32 %v1171, 1.442695
      %v1208 = vpow.pop %v1207
      %v1209 = vmul.f32 %v1172, 1.442695
      %v1210 = vpow.pop %v1209
      %v1211 = vmul.f32 %v1173, 1.442695
      %v1212 = vpow.pop %v1211
      %v1213 = vmul.f32 %v1174, 1.442695
      %v1214 = vpow.pop %v1213
      %v1215 = vmul.f32 %v1175, 1.442695
      %v1216 = vpow.pop %v1215
      %v1217 = vmul.f32 %v1176, 1.442695
      %v1218 = vpow.pop %v1217
      %v1219 = vmul.f32 %v1177, 1.442695
      %v1220 = vpow.pop %v1219
      %v1221 = vmul.f32 %v1178, 1.442695
      %v1222 = vpow.pop %v1221
      %v1223 = vmul.f32 %v1179, 1.442695
      %v1224 = vpow.pop %v1223
      %v1225 = vmul.f32 %v1180, 1.442695
      %v1226 = vpow.pop %v1225
      %v1227 = vmul.f32 %v1181, 1.442695
      %v1228 = vpow.pop %v1227
      %v1229 = vmul.f32 %v1182, 1.442695
      %v1230 = vpow.pop %v1229
      %v1231 = vmul.f32 %v1183, 1.442695
      %v1232 = vpow.pop %v1231
      %v1233 = vmul.f32 %v1184, 1.442695
      %v1234 = vpow.pop %v1233
      %v1235 = vmul.f32 %v1185, 1.442695
      %v1236 = vpow.pop %v1235
      %v1237 = vmul.f32 %v1186, 1.442695
      %v1238 = vpow.pop %v1237
      %v1239 = vmul.f32 %v1187, 1.442695
      %v1240 = vpow.pop %v1239
      %v1241 = vmul.f32 %v1188, 1.442695
      %v1242 = vpow.pop %v1241
      %v1243 = vmul.f32 %v1189, 1.442695
      %v1244 = vpow.pop %v1243
      %v1245 = vmul.f32 %v1190, 1.442695
      %v1246 = vpow.pop %v1245
      %v1247 = vmul.f32 %v1191, 1.442695
      %v1248 = vpow.pop %v1247
      %v1249 = vmul.f32 %v1192, 1.442695
      %v1250 = vpow.pop %v1249
      %v1251 = vmul.f32 %v1193, 1.442695
      %v1252 = vpow.pop %v1251
      %v1253 = vmul.f32 %v1194, 1.442695
      %v1254 = vpow.pop %v1253
      %v1255 = vmul.f32 %v1195, 1.442695
      %v1256 = vpow.pop %v1255
      %v1257 = vmul.f32 %v1196, 1.442695
      %v1258 = vpow.pop %v1257
      %v1259 = vmul.f32 %v1197, 1.442695
      %v1260 = vpow.pop %v1259
      %v1261 = vmul.f32 %v1198, 1.442695
      %v1262 = vpow.pop %v1261
      %v1263 = vadd.f32 %v1200, 1.0
      %v1264 = vadd.f32 %v1202, 1.0
      %v1265 = vadd.f32 %v1204, 1.0
      %v1266 = vadd.f32 %v1206, 1.0
      %v1267 = vadd.f32 %v1208, 1.0
      %v1268 = vadd.f32 %v1210, 1.0
      %v1269 = vadd.f32 %v1212, 1.0
      %v1270 = vadd.f32 %v1214, 1.0
      %v1271 = vadd.f32 %v1216, 1.0
      %v1272 = vadd.f32 %v1218, 1.0
      %v1273 = vadd.f32 %v1220, 1.0
      %v1274 = vadd.f32 %v1222, 1.0
      %v1275 = vadd.f32 %v1224, 1.0
      %v1276 = vadd.f32 %v1226, 1.0
      %v1277 = vadd.f32 %v1228, 1.0
      %v1278 = vadd.f32 %v1230, 1.0
      %v1279 = vadd.f32 %v1232, 1.0
      %v1280 = vadd.f32 %v1234, 1.0
      %v1281 = vadd.f32 %v1236, 1.0
      %v1282 = vadd.f32 %v1238, 1.0
      %v1283 = vadd.f32 %v1240, 1.0
      %v1284 = vadd.f32 %v1242, 1.0
      %v1285 = vadd.f32 %v1244, 1.0
      %v1286 = vadd.f32 %v1246, 1.0
      %v1287 = vadd.f32 %v1248, 1.0
      %v1288 = vadd.f32 %v1250, 1.0
      %v1289 = vadd.f32 %v1252, 1.0
      %v1290 = vadd.f32 %v1254, 1.0
      %v1291 = vadd.f32 %v1256, 1.0
      %v1292 = vadd.f32 %v1258, 1.0
      %v1293 = vadd.f32 %v1260, 1.0
      %v1294 = vadd.f32 %v1262, 1.0
      %v1295 = vrcp.pop %v1263
      %v1296 = vmul.f32 %v1263, %v1295
      %v1297 = vsub.f32 1.0, %v1296
      %v1298 = vmul.f32 %v1295, %v1297
      %v1299 = vadd.f32 %v1295, %v1298
      %vm1300 = vweird.f32 %v1263
      %vm1301 = vweird.f32 %v1295
      %vm1302 = vmor %vm1300, %vm1301
      %v1303 = vsel %vm1302, %v1295, %v1299
      %v1304 = vand.u32 2147483647, %v1263
      %vm1305 = vcmp.eq.f32.partialorder %v1304, 8.507059e+37
      %v1306 = vand.u32 %v1263, 2147483648
      %v1307 = vor.u32 1.1754944e-38, %v1306
      %v1308 = vsel %vm1305, %v1307, %v1303
      %v1309 = vmul.f32 1.0, %v1308
      %v1310 = vrcp.pop %v1264
      %v1311 = vmul.f32 %v1264, %v1310
      %v1312 = vsub.f32 1.0, %v1311
      %v1313 = vmul.f32 %v1310, %v1312
      %v1314 = vadd.f32 %v1310, %v1313
      %vm1315 = vweird.f32 %v1264
      %vm1316 = vweird.f32 %v1310
      %vm1317 = vmor %vm1315, %vm1316
      %v1318 = vsel %vm1317, %v1310, %v1314
      %v1319 = vand.u32 2147483647, %v1264
      %vm1320 = vcmp.eq.f32.partialorder %v1319, 8.507059e+37
      %v1321 = vand.u32 %v1264, 2147483648
      %v1322 = vor.u32 1.1754944e-38, %v1321
      %v1323 = vsel %vm1320, %v1322, %v1318
      %v1324 = vmul.f32 1.0, %v1323
      %v1325 = vrcp.pop %v1265
      %v1326 = vmul.f32 %v1265, %v1325
      %v1327 = vsub.f32 1.0, %v1326
      %v1328 = vmul.f32 %v1325, %v1327
      %v1329 = vadd.f32 %v1325, %v1328
      %vm1330 = vweird.f32 %v1265
      %vm1331 = vweird.f32 %v1325
      %vm1332 = vmor %vm1330, %vm1331
      %v1333 = vsel %vm1332, %v1325, %v1329
      %v1334 = vand.u32 2147483647, %v1265
      %vm1335 = vcmp.eq.f32.partialorder %v1334, 8.507059e+37
      %v1336 = vand.u32 %v1265, 2147483648
      %v1337 = vor.u32 1.1754944e-38, %v1336
      %v1338 = vsel %vm1335, %v1337, %v1333
      %v1339 = vmul.f32 1.0, %v1338
      %v1340 = vrcp.pop %v1266
      %v1341 = vmul.f32 %v1266, %v1340
      %v1342 = vsub.f32 1.0, %v1341
      %v1343 = vmul.f32 %v1340, %v1342
      %v1344 = vadd.f32 %v1340, %v1343
      %vm1345 = vweird.f32 %v1266
      %vm1346 = vweird.f32 %v1340
      %vm1347 = vmor %vm1345, %vm1346
      %v1348 = vsel %vm1347, %v1340, %v1344
      %v1349 = vand.u32 2147483647, %v1266
      %vm1350 = vcmp.eq.f32.partialorder %v1349, 8.507059e+37
      %v1351 = vand.u32 %v1266, 2147483648
      %v1352 = vor.u32 1.1754944e-38, %v1351
      %v1353 = vsel %vm1350, %v1352, %v1348
      %v1354 = vmul.f32 1.0, %v1353
      %v1355 = vrcp.pop %v1267
      %v1356 = vmul.f32 %v1267, %v1355
      %v1357 = vsub.f32 1.0, %v1356
      %v1358 = vmul.f32 %v1355, %v1357
      %v1359 = vadd.f32 %v1355, %v1358
      %vm1360 = vweird.f32 %v1267
      %vm1361 = vweird.f32 %v1355
      %vm1362 = vmor %vm1360, %vm1361
      %v1363 = vsel %vm1362, %v1355, %v1359
      %v1364 = vand.u32 2147483647, %v1267
      %vm1365 = vcmp.eq.f32.partialorder %v1364, 8.507059e+37
      %v1366 = vand.u32 %v1267, 2147483648
      %v1367 = vor.u32 1.1754944e-38, %v1366
      %v1368 = vsel %vm1365, %v1367, %v1363
      %v1369 = vmul.f32 1.0, %v1368
      %v1370 = vrcp.pop %v1268
      %v1371 = vmul.f32 %v1268, %v1370
      %v1372 = vsub.f32 1.0, %v1371
      %v1373 = vmul.f32 %v1370, %v1372
      %v1374 = vadd.f32 %v1370, %v1373
      %vm1375 = vweird.f32 %v1268
      %vm1376 = vweird.f32 %v1370
      %vm1377 = vmor %vm1375, %vm1376
      %v1378 = vsel %vm1377, %v1370, %v1374
      %v1379 = vand.u32 2147483647, %v1268
      %vm1380 = vcmp.eq.f32.partialorder %v1379, 8.507059e+37
      %v1381 = vand.u32 %v1268, 2147483648
      %v1382 = vor.u32 1.1754944e-38, %v1381
      %v1383 = vsel %vm1380, %v1382, %v1378
      %v1384 = vmul.f32 1.0, %v1383
      %v1385 = vrcp.pop %v1269
      %v1386 = vmul.f32 %v1269, %v1385
      %v1387 = vsub.f32 1.0, %v1386
      %v1388 = vmul.f32 %v1385, %v1387
      %v1389 = vadd.f32 %v1385, %v1388
      %vm1390 = vweird.f32 %v1269
      %vm1391 = vweird.f32 %v1385
      %vm1392 = vmor %vm1390, %vm1391
      %v1393 = vsel %vm1392, %v1385, %v1389
      %v1394 = vand.u32 2147483647, %v1269
      %vm1395 = vcmp.eq.f32.partialorder %v1394, 8.507059e+37
      %v1396 = vand.u32 %v1269, 2147483648
      %v1397 = vor.u32 1.1754944e-38, %v1396
      %v1398 = vsel %vm1395, %v1397, %v1393
      %v1399 = vmul.f32 1.0, %v1398
      %v1400 = vrcp.pop %v1270
      %v1401 = vmul.f32 %v1270, %v1400
      %v1402 = vsub.f32 1.0, %v1401
      %v1403 = vmul.f32 %v1400, %v1402
      %v1404 = vadd.f32 %v1400, %v1403
      %vm1405 = vweird.f32 %v1270
      %vm1406 = vweird.f32 %v1400
      %vm1407 = vmor %vm1405, %vm1406
      %v1408 = vsel %vm1407, %v1400, %v1404
      %v1409 = vand.u32 2147483647, %v1270
      %vm1410 = vcmp.eq.f32.partialorder %v1409, 8.507059e+37
      %v1411 = vand.u32 %v1270, 2147483648
      %v1412 = vor.u32 1.1754944e-38, %v1411
      %v1413 = vsel %vm1410, %v1412, %v1408
      %v1414 = vmul.f32 1.0, %v1413
      %v1415 = vrcp.pop %v1271
      %v1416 = vmul.f32 %v1271, %v1415
      %v1417 = vsub.f32 1.0, %v1416
      %v1418 = vmul.f32 %v1415, %v1417
      %v1419 = vadd.f32 %v1415, %v1418
      %vm1420 = vweird.f32 %v1271
      %vm1421 = vweird.f32 %v1415
      %vm1422 = vmor %vm1420, %vm1421
      %v1423 = vsel %vm1422, %v1415, %v1419
      %v1424 = vand.u32 2147483647, %v1271
      %vm1425 = vcmp.eq.f32.partialorder %v1424, 8.507059e+37
      %v1426 = vand.u32 %v1271, 2147483648
      %v1427 = vor.u32 1.1754944e-38, %v1426
      %v1428 = vsel %vm1425, %v1427, %v1423
      %v1429 = vmul.f32 1.0, %v1428
      %v1430 = vrcp.pop %v1272
      %v1431 = vmul.f32 %v1272, %v1430
      %v1432 = vsub.f32 1.0, %v1431
      %v1433 = vmul.f32 %v1430, %v1432
      %v1434 = vadd.f32 %v1430, %v1433
      %vm1435 = vweird.f32 %v1272
      %vm1436 = vweird.f32 %v1430
      %vm1437 = vmor %vm1435, %vm1436
      %v1438 = vsel %vm1437, %v1430, %v1434
      %v1439 = vand.u32 2147483647, %v1272
      %vm1440 = vcmp.eq.f32.partialorder %v1439, 8.507059e+37
      %v1441 = vand.u32 %v1272, 2147483648
      %v1442 = vor.u32 1.1754944e-38, %v1441
      %v1443 = vsel %vm1440, %v1442, %v1438
      %v1444 = vmul.f32 1.0, %v1443
      %v1445 = vrcp.pop %v1273
      %v1446 = vmul.f32 %v1273, %v1445
      %v1447 = vsub.f32 1.0, %v1446
      %v1448 = vmul.f32 %v1445, %v1447
      %v1449 = vadd.f32 %v1445, %v1448
      %vm1450 = vweird.f32 %v1273
      %vm1451 = vweird.f32 %v1445
      %vm1452 = vmor %vm1450, %vm1451
      %v1453 = vsel %vm1452, %v1445, %v1449
      %v1454 = vand.u32 2147483647, %v1273
      %vm1455 = vcmp.eq.f32.partialorder %v1454, 8.507059e+37
      %v1456 = vand.u32 %v1273, 2147483648
      %v1457 = vor.u32 1.1754944e-38, %v1456
      %v1458 = vsel %vm1455, %v1457, %v1453
      %v1459 = vmul.f32 1.0, %v1458
      %v1460 = vrcp.pop %v1274
      %v1461 = vmul.f32 %v1274, %v1460
      %v1462 = vsub.f32 1.0, %v1461
      %v1463 = vmul.f32 %v1460, %v1462
      %v1464 = vadd.f32 %v1460, %v1463
      %vm1465 = vweird.f32 %v1274
      %vm1466 = vweird.f32 %v1460
      %vm1467 = vmor %vm1465, %vm1466
      %v1468 = vsel %vm1467, %v1460, %v1464
      %v1469 = vand.u32 2147483647, %v1274
      %vm1470 = vcmp.eq.f32.partialorder %v1469, 8.507059e+37
      %v1471 = vand.u32 %v1274, 2147483648
      %v1472 = vor.u32 1.1754944e-38, %v1471
      %v1473 = vsel %vm1470, %v1472, %v1468
      %v1474 = vmul.f32 1.0, %v1473
      %v1475 = vrcp.pop %v1275
      %v1476 = vmul.f32 %v1275, %v1475
      %v1477 = vsub.f32 1.0, %v1476
      %v1478 = vmul.f32 %v1475, %v1477
      %v1479 = vadd.f32 %v1475, %v1478
      %vm1480 = vweird.f32 %v1275
      %vm1481 = vweird.f32 %v1475
      %vm1482 = vmor %vm1480, %vm1481
      %v1483 = vsel %vm1482, %v1475, %v1479
      %v1484 = vand.u32 2147483647, %v1275
      %vm1485 = vcmp.eq.f32.partialorder %v1484, 8.507059e+37
      %v1486 = vand.u32 %v1275, 2147483648
      %v1487 = vor.u32 1.1754944e-38, %v1486
      %v1488 = vsel %vm1485, %v1487, %v1483
      %v1489 = vmul.f32 1.0, %v1488
      %v1490 = vrcp.pop %v1276
      %v1491 = vmul.f32 %v1276, %v1490
      %v1492 = vsub.f32 1.0, %v1491
      %v1493 = vmul.f32 %v1490, %v1492
      %v1494 = vadd.f32 %v1490, %v1493
      %vm1495 = vweird.f32 %v1276
      %vm1496 = vweird.f32 %v1490
      %vm1497 = vmor %vm1495, %vm1496
      %v1498 = vsel %vm1497, %v1490, %v1494
      %v1499 = vand.u32 2147483647, %v1276
      %vm1500 = vcmp.eq.f32.partialorder %v1499, 8.507059e+37
      %v1501 = vand.u32 %v1276, 2147483648
      %v1502 = vor.u32 1.1754944e-38, %v1501
      %v1503 = vsel %vm1500, %v1502, %v1498
      %v1504 = vmul.f32 1.0, %v1503
      %v1505 = vrcp.pop %v1277
      %v1506 = vmul.f32 %v1277, %v1505
      %v1507 = vsub.f32 1.0, %v1506
      %v1508 = vmul.f32 %v1505, %v1507
      %v1509 = vadd.f32 %v1505, %v1508
      %vm1510 = vweird.f32 %v1277
      %vm1511 = vweird.f32 %v1505
      %vm1512 = vmor %vm1510, %vm1511
      %v1513 = vsel %vm1512, %v1505, %v1509
      %v1514 = vand.u32 2147483647, %v1277
      %vm1515 = vcmp.eq.f32.partialorder %v1514, 8.507059e+37
      %v1516 = vand.u32 %v1277, 2147483648
      %v1517 = vor.u32 1.1754944e-38, %v1516
      %v1518 = vsel %vm1515, %v1517, %v1513
      %v1519 = vmul.f32 1.0, %v1518
      %v1520 = vrcp.pop %v1278
      %v1521 = vmul.f32 %v1278, %v1520
      %v1522 = vsub.f32 1.0, %v1521
      %v1523 = vmul.f32 %v1520, %v1522
      %v1524 = vadd.f32 %v1520, %v1523
      %vm1525 = vweird.f32 %v1278
      %vm1526 = vweird.f32 %v1520
      %vm1527 = vmor %vm1525, %vm1526
      %v1528 = vsel %vm1527, %v1520, %v1524
      %v1529 = vand.u32 2147483647, %v1278
      %vm1530 = vcmp.eq.f32.partialorder %v1529, 8.507059e+37
      %v1531 = vand.u32 %v1278, 2147483648
      %v1532 = vor.u32 1.1754944e-38, %v1531
      %v1533 = vsel %vm1530, %v1532, %v1528
      %v1534 = vmul.f32 1.0, %v1533
      %v1535 = vrcp.pop %v1279
      %v1536 = vmul.f32 %v1279, %v1535
      %v1537 = vsub.f32 1.0, %v1536
      %v1538 = vmul.f32 %v1535, %v1537
      %v1539 = vadd.f32 %v1535, %v1538
      %vm1540 = vweird.f32 %v1279
      %vm1541 = vweird.f32 %v1535
      %vm1542 = vmor %vm1540, %vm1541
      %v1543 = vsel %vm1542, %v1535, %v1539
      %v1544 = vand.u32 2147483647, %v1279
      %vm1545 = vcmp.eq.f32.partialorder %v1544, 8.507059e+37
      %v1546 = vand.u32 %v1279, 2147483648
      %v1547 = vor.u32 1.1754944e-38, %v1546
      %v1548 = vsel %vm1545, %v1547, %v1543
      %v1549 = vmul.f32 1.0, %v1548
      %v1550 = vrcp.pop %v1280
      %v1551 = vmul.f32 %v1280, %v1550
      %v1552 = vsub.f32 1.0, %v1551
      %v1553 = vmul.f32 %v1550, %v1552
      %v1554 = vadd.f32 %v1550, %v1553
      %vm1555 = vweird.f32 %v1280
      %vm1556 = vweird.f32 %v1550
      %vm1557 = vmor %vm1555, %vm1556
      %v1558 = vsel %vm1557, %v1550, %v1554
      %v1559 = vand.u32 2147483647, %v1280
      %vm1560 = vcmp.eq.f32.partialorder %v1559, 8.507059e+37
      %v1561 = vand.u32 %v1280, 2147483648
      %v1562 = vor.u32 1.1754944e-38, %v1561
      %v1563 = vsel %vm1560, %v1562, %v1558
      %v1564 = vmul.f32 1.0, %v1563
      %v1565 = vrcp.pop %v1281
      %v1566 = vmul.f32 %v1281, %v1565
      %v1567 = vsub.f32 1.0, %v1566
      %v1568 = vmul.f32 %v1565, %v1567
      %v1569 = vadd.f32 %v1565, %v1568
      %vm1570 = vweird.f32 %v1281
      %vm1571 = vweird.f32 %v1565
      %vm1572 = vmor %vm1570, %vm1571
      %v1573 = vsel %vm1572, %v1565, %v1569
      %v1574 = vand.u32 2147483647, %v1281
      %vm1575 = vcmp.eq.f32.partialorder %v1574, 8.507059e+37
      %v1576 = vand.u32 %v1281, 2147483648
      %v1577 = vor.u32 1.1754944e-38, %v1576
      %v1578 = vsel %vm1575, %v1577, %v1573
      %v1579 = vmul.f32 1.0, %v1578
      %v1580 = vrcp.pop %v1282
      %v1581 = vmul.f32 %v1282, %v1580
      %v1582 = vsub.f32 1.0, %v1581
      %v1583 = vmul.f32 %v1580, %v1582
      %v1584 = vadd.f32 %v1580, %v1583
      %vm1585 = vweird.f32 %v1282
      %vm1586 = vweird.f32 %v1580
      %vm1587 = vmor %vm1585, %vm1586
      %v1588 = vsel %vm1587, %v1580, %v1584
      %v1589 = vand.u32 2147483647, %v1282
      %vm1590 = vcmp.eq.f32.partialorder %v1589, 8.507059e+37
      %v1591 = vand.u32 %v1282, 2147483648
      %v1592 = vor.u32 1.1754944e-38, %v1591
      %v1593 = vsel %vm1590, %v1592, %v1588
      %v1594 = vmul.f32 1.0, %v1593
      %v1595 = vrcp.pop %v1283
      %v1596 = vmul.f32 %v1283, %v1595
      %v1597 = vsub.f32 1.0, %v1596
      %v1598 = vmul.f32 %v1595, %v1597
      %v1599 = vadd.f32 %v1595, %v1598
      %vm1600 = vweird.f32 %v1283
      %vm1601 = vweird.f32 %v1595
      %vm1602 = vmor %vm1600, %vm1601
      %v1603 = vsel %vm1602, %v1595, %v1599
      %v1604 = vand.u32 2147483647, %v1283
      %vm1605 = vcmp.eq.f32.partialorder %v1604, 8.507059e+37
      %v1606 = vand.u32 %v1283, 2147483648
      %v1607 = vor.u32 1.1754944e-38, %v1606
      %v1608 = vsel %vm1605, %v1607, %v1603
      %v1609 = vmul.f32 1.0, %v1608
      %v1610 = vrcp.pop %v1284
      %v1611 = vmul.f32 %v1284, %v1610
      %v1612 = vsub.f32 1.0, %v1611
      %v1613 = vmul.f32 %v1610, %v1612
      %v1614 = vadd.f32 %v1610, %v1613
      %vm1615 = vweird.f32 %v1284
      %vm1616 = vweird.f32 %v1610
      %vm1617 = vmor %vm1615, %vm1616
      %v1618 = vsel %vm1617, %v1610, %v1614
      %v1619 = vand.u32 2147483647, %v1284
      %vm1620 = vcmp.eq.f32.partialorder %v1619, 8.507059e+37
      %v1621 = vand.u32 %v1284, 2147483648
      %v1622 = vor.u32 1.1754944e-38, %v1621
      %v1623 = vsel %vm1620, %v1622, %v1618
      %v1624 = vmul.f32 1.0, %v1623
      %v1625 = vrcp.pop %v1285
      %v1626 = vmul.f32 %v1285, %v1625
      %v1627 = vsub.f32 1.0, %v1626
      %v1628 = vmul.f32 %v1625, %v1627
      %v1629 = vadd.f32 %v1625, %v1628
      %vm1630 = vweird.f32 %v1285
      %vm1631 = vweird.f32 %v1625
      %vm1632 = vmor %vm1630, %vm1631
      %v1633 = vsel %vm1632, %v1625, %v1629
      %v1634 = vand.u32 2147483647, %v1285
      %vm1635 = vcmp.eq.f32.partialorder %v1634, 8.507059e+37
      %v1636 = vand.u32 %v1285, 2147483648
      %v1637 = vor.u32 1.1754944e-38, %v1636
      %v1638 = vsel %vm1635, %v1637, %v1633
      %v1639 = vmul.f32 1.0, %v1638
      %v1640 = vrcp.pop %v1286
      %v1641 = vmul.f32 %v1286, %v1640
      %v1642 = vsub.f32 1.0, %v1641
      %v1643 = vmul.f32 %v1640, %v1642
      %v1644 = vadd.f32 %v1640, %v1643
      %vm1645 = vweird.f32 %v1286
      %vm1646 = vweird.f32 %v1640
      %vm1647 = vmor %vm1645, %vm1646
      %v1648 = vsel %vm1647, %v1640, %v1644
      %v1649 = vand.u32 2147483647, %v1286
      %vm1650 = vcmp.eq.f32.partialorder %v1649, 8.507059e+37
      %v1651 = vand.u32 %v1286, 2147483648
      %v1652 = vor.u32 1.1754944e-38, %v1651
      %v1653 = vsel %vm1650, %v1652, %v1648
      %v1654 = vmul.f32 1.0, %v1653
      %v1655 = vrcp.pop %v1287
      %v1656 = vmul.f32 %v1287, %v1655
      %v1657 = vsub.f32 1.0, %v1656
      %v1658 = vmul.f32 %v1655, %v1657
      %v1659 = vadd.f32 %v1655, %v1658
      %vm1660 = vweird.f32 %v1287
      %vm1661 = vweird.f32 %v1655
      %vm1662 = vmor %vm1660, %vm1661
      %v1663 = vsel %vm1662, %v1655, %v1659
      %v1664 = vand.u32 2147483647, %v1287
      %vm1665 = vcmp.eq.f32.partialorder %v1664, 8.507059e+37
      %v1666 = vand.u32 %v1287, 2147483648
      %v1667 = vor.u32 1.1754944e-38, %v1666
      %v1668 = vsel %vm1665, %v1667, %v1663
      %v1669 = vmul.f32 1.0, %v1668
      %v1670 = vrcp.pop %v1288
      %v1671 = vmul.f32 %v1288, %v1670
      %v1672 = vsub.f32 1.0, %v1671
      %v1673 = vmul.f32 %v1670, %v1672
      %v1674 = vadd.f32 %v1670, %v1673
      %vm1675 = vweird.f32 %v1288
      %vm1676 = vweird.f32 %v1670
      %vm1677 = vmor %vm1675, %vm1676
      %v1678 = vsel %vm1677, %v1670, %v1674
      %v1679 = vand.u32 2147483647, %v1288
      %vm1680 = vcmp.eq.f32.partialorder %v1679, 8.507059e+37
      %v1681 = vand.u32 %v1288, 2147483648
      %v1682 = vor.u32 1.1754944e-38, %v1681
      %v1683 = vsel %vm1680, %v1682, %v1678
      %v1684 = vmul.f32 1.0, %v1683
      %v1685 = vrcp.pop %v1289
      %v1686 = vmul.f32 %v1289, %v1685
      %v1687 = vsub.f32 1.0, %v1686
      %v1688 = vmul.f32 %v1685, %v1687
      %v1689 = vadd.f32 %v1685, %v1688
      %vm1690 = vweird.f32 %v1289
      %vm1691 = vweird.f32 %v1685
      %vm1692 = vmor %vm1690, %vm1691
      %v1693 = vsel %vm1692, %v1685, %v1689
      %v1694 = vand.u32 2147483647, %v1289
      %vm1695 = vcmp.eq.f32.partialorder %v1694, 8.507059e+37
      %v1696 = vand.u32 %v1289, 2147483648
      %v1697 = vor.u32 1.1754944e-38, %v1696
      %v1698 = vsel %vm1695, %v1697, %v1693
      %v1699 = vmul.f32 1.0, %v1698
      %v1700 = vrcp.pop %v1290
      %v1701 = vmul.f32 %v1290, %v1700
      %v1702 = vsub.f32 1.0, %v1701
      %v1703 = vmul.f32 %v1700, %v1702
      %v1704 = vadd.f32 %v1700, %v1703
      %vm1705 = vweird.f32 %v1290
      %vm1706 = vweird.f32 %v1700
      %vm1707 = vmor %vm1705, %vm1706
      %v1708 = vsel %vm1707, %v1700, %v1704
      %v1709 = vand.u32 2147483647, %v1290
      %vm1710 = vcmp.eq.f32.partialorder %v1709, 8.507059e+37
      %v1711 = vand.u32 %v1290, 2147483648
      %v1712 = vor.u32 1.1754944e-38, %v1711
      %v1713 = vsel %vm1710, %v1712, %v1708
      %v1714 = vmul.f32 1.0, %v1713
      %v1715 = vrcp.pop %v1291
      %v1716 = vmul.f32 %v1291, %v1715
      %v1717 = vsub.f32 1.0, %v1716
      %v1718 = vmul.f32 %v1715, %v1717
      %v1719 = vadd.f32 %v1715, %v1718
      %vm1720 = vweird.f32 %v1291
      %vm1721 = vweird.f32 %v1715
      %vm1722 = vmor %vm1720, %vm1721
      %v1723 = vsel %vm1722, %v1715, %v1719
      %v1724 = vand.u32 2147483647, %v1291
      %vm1725 = vcmp.eq.f32.partialorder %v1724, 8.507059e+37
      %v1726 = vand.u32 %v1291, 2147483648
      %v1727 = vor.u32 1.1754944e-38, %v1726
      %v1728 = vsel %vm1725, %v1727, %v1723
      %v1729 = vmul.f32 1.0, %v1728
      %v1730 = vrcp.pop %v1292
      %v1731 = vmul.f32 %v1292, %v1730
      %v1732 = vsub.f32 1.0, %v1731
      %v1733 = vmul.f32 %v1730, %v1732
      %v1734 = vadd.f32 %v1730, %v1733
      %vm1735 = vweird.f32 %v1292
      %vm1736 = vweird.f32 %v1730
      %vm1737 = vmor %vm1735, %vm1736
      %v1738 = vsel %vm1737, %v1730, %v1734
      %v1739 = vand.u32 2147483647, %v1292
      %vm1740 = vcmp.eq.f32.partialorder %v1739, 8.507059e+37
      %v1741 = vand.u32 %v1292, 2147483648
      %v1742 = vor.u32 1.1754944e-38, %v1741
      %v1743 = vsel %vm1740, %v1742, %v1738
      %v1744 = vmul.f32 1.0, %v1743
      %v1745 = vrcp.pop %v1293
      %v1746 = vmul.f32 %v1293, %v1745
      %v1747 = vsub.f32 1.0, %v1746
      %v1748 = vmul.f32 %v1745, %v1747
      %v1749 = vadd.f32 %v1745, %v1748
      %vm1750 = vweird.f32 %v1293
      %vm1751 = vweird.f32 %v1745
      %vm1752 = vmor %vm1750, %vm1751
      %v1753 = vsel %vm1752, %v1745, %v1749
      %v1754 = vand.u32 2147483647, %v1293
      %vm1755 = vcmp.eq.f32.partialorder %v1754, 8.507059e+37
      %v1756 = vand.u32 %v1293, 2147483648
      %v1757 = vor.u32 1.1754944e-38, %v1756
      %v1758 = vsel %vm1755, %v1757, %v1753
      %v1759 = vmul.f32 1.0, %v1758
      %v1760 = vrcp.pop %v1294
      %v1761 = vmul.f32 %v1294, %v1760
      %v1762 = vsub.f32 1.0, %v1761
      %v1763 = vmul.f32 %v1760, %v1762
      %v1764 = vadd.f32 %v1760, %v1763
      %vm1765 = vweird.f32 %v1294
      %vm1766 = vweird.f32 %v1760
      %vm1767 = vmor %vm1765, %vm1766
      %v1768 = vsel %vm1767, %v1760, %v1764
      %v1769 = vand.u32 2147483647, %v1294
      %vm1770 = vcmp.eq.f32.partialorder %v1769, 8.507059e+37
      %v1771 = vand.u32 %v1294, 2147483648
      %v1772 = vor.u32 1.1754944e-38, %v1771
      %v1773 = vsel %vm1770, %v1772, %v1768
      %v1774 = vmul.f32 1.0, %v1773
      %v1775 = vmul.f32 %v1135, %v1309
      %v1776 = vmul.f32 %v1136, %v1324
      %v1777 = vmul.f32 %v1137, %v1339
      %v1778 = vmul.f32 %v1138, %v1354
      %v1779 = vmul.f32 %v1139, %v1369
      %v1780 = vmul.f32 %v1140, %v1384
      %v1781 = vmul.f32 %v1141, %v1399
      %v1782 = vmul.f32 %v1142, %v1414
      %v1783 = vmul.f32 %v1143, %v1429
      %v1784 = vmul.f32 %v1144, %v1444
      %v1785 = vmul.f32 %v1145, %v1459
      %v1786 = vmul.f32 %v1146, %v1474
      %v1787 = vmul.f32 %v1147, %v1489
      %v1788 = vmul.f32 %v1148, %v1504
      %v1789 = vmul.f32 %v1149, %v1519
      %v1790 = vmul.f32 %v1150, %v1534
      %v1791 = vmul.f32 %v1151, %v1549
      %v1792 = vmul.f32 %v1152, %v1564
      %v1793 = vmul.f32 %v1153, %v1579
      %v1794 = vmul.f32 %v1154, %v1594
      %v1795 = vmul.f32 %v1155, %v1609
      %v1796 = vmul.f32 %v1156, %v1624
      %v1797 = vmul.f32 %v1157, %v1639
      %v1798 = vmul.f32 %v1158, %v1654
      %v1799 = vmul.f32 %v1159, %v1669
      %v1800 = vmul.f32 %v1160, %v1684
      %v1801 = vmul.f32 %v1161, %v1699
      %v1802 = vmul.f32 %v1162, %v1714
      %v1803 = vmul.f32 %v1163, %v1729
      %v1804 = vmul.f32 %v1164, %v1744
      %v1805 = vmul.f32 %v1165, %v1759
      %v1806 = vmul.f32 %v1166, %v1774
      %1807 = vst [vmem:[%s240] sm:$0xff] %v1775
      %1808 = vst [vmem:[%s240 + $0x8] sm:$0xff] %v1776
      %1809 = vst [vmem:[%s240 + $0x10] sm:$0xff] %v1777
      %1810 = vst [vmem:[%s240 + $0x18] sm:$0xff] %v1778
      %1811 = vst [vmem:[%s240 + $0x20] sm:$0xff] %v1779
      %1812 = vst [vmem:[%s240 + $0x28] sm:$0xff] %v1780
      %1813 = vst [vmem:[%s240 + $0x30] sm:$0xff] %v1781
      %1814 = vst [vmem:[%s240 + $0x38] sm:$0xff] %v1782
      %1815 = vst [vmem:[%s240 + $0x40] sm:$0xff] %v1783
      %1816 = vst [vmem:[%s240 + $0x48] sm:$0xff] %v1784
      %1817 = vst [vmem:[%s240 + $0x50] sm:$0xff] %v1785
      %1818 = vst [vmem:[%s240 + $0x58] sm:$0xff] %v1786
      %1819 = vst [vmem:[%s240 + $0x60] sm:$0xff] %v1787
      %1820 = vst [vmem:[%s240 + $0x68] sm:$0xff] %v1788
      %1821 = vst [vmem:[%s240 + $0x70] sm:$0xff] %v1789
      %1822 = vst [vmem:[%s240 + $0x78] sm:$0xff] %v1790
      %1823 = vst [vmem:[%s240 + $0x80] sm:$0xff] %v1791
      %1824 = vst [vmem:[%s240 + $0x88] sm:$0xff] %v1792
      %1825 = vst [vmem:[%s240 + $0x90] sm:$0xff] %v1793
      %1826 = vst [vmem:[%s240 + $0x98] sm:$0xff] %v1794
      %1827 = vst [vmem:[%s240 + $0xa0] sm:$0xff] %v1795
      %1828 = vst [vmem:[%s240 + $0xa8] sm:$0xff] %v1796
      %1829 = vst [vmem:[%s240 + $0xb0] sm:$0xff] %v1797
      %1830 = vst [vmem:[%s240 + $0xb8] sm:$0xff] %v1798
      %1831 = vst [vmem:[%s240 + $0xc0] sm:$0xff] %v1799
      %1832 = vst [vmem:[%s240 + $0xc8] sm:$0xff] %v1800
      %1833 = vst [vmem:[%s240 + $0xd0] sm:$0xff] %v1801
      %1834 = vst [vmem:[%s240 + $0xd8] sm:$0xff] %v1802
      %1835 = vst [vmem:[%s240 + $0xe0] sm:$0xff] %v1803
      %1836 = vst [vmem:[%s240 + $0xe8] sm:$0xff] %v1804
      %1837 = vst [vmem:[%s240 + $0xf0] sm:$0xff] %v1805
      %1838 = vst [vmem:[%s240 + $0xf8] sm:$0xff] %v1806
      %s1839 = smul.u32 16, %s21
      %p1840 = scmp.lt.s32.totalorder %s19, 1
      %s1841 = scalar_select %p1840, %s19, 1
      %p1842 = scmp.lt.s32.totalorder %s1839, 15
      %s1843 = scalar_select %p1842, %s1839, 15
      %p1844 = scmp.lt.s32.totalorder %s20, 0
      %s1845 = scalar_select %p1844, %s20, 0
      %s1846 = smul.addr %s1843, 2
      %s1847 = sadd.s32 %s1845, %s1846
      %s1848 = smul.addr %s1841, 32
      %s1849 = sadd.s32 %s1847, %s1848
      %s1850 = smul.addr %s1849, 8
      %s1851 = scalar_lea.vmem %s3, %s1850
      // Predicated region
      $region33: #{base_conv_forward.1} parent=31 // pred_check
        %p1852 = pneg %p133
      $region34: #{base_conv_forward.1} parent=31 // pred_check_branch
        %1854 = sbr.rel (%p1852) target = $region36
      $region35: #{base_conv_forward.1} parent=31 // pred_region
        %s1855 = smul.u32 16, %s21
      $region36: #{base_conv_forward.1} parent=31 // pred_fallthru
        _
    $region32: #{base_conv_forward.1} parent=5 // pred_fallthru
      _
    %p1856 = scmp.le.s32.totalorder 2, %s9
    // Predicated region
    $region37: #{base_conv_forward.1} parent=5 // pred_check
      %p1857 = pneg %p1856
    $region38: #{base_conv_forward.1} parent=5 // pred_check_branch
      %1859 = sbr.rel (%p1857) target = $region40
    $region39: #{base_conv_forward.1} parent=5 // pred_region
      %s1860 = ssub.s32 %s9, 2
      // Predicated region
      $region41: #{base_conv_forward.1} parent=39 // pred_check
        %p1861 = pneg %p139
      $region42: #{base_conv_forward.1} parent=39 // pred_check_branch
        %1863 = sbr.rel (%p1861) target = $region44
      $region43: #{base_conv_forward.1} parent=39 // pred_region
        %s1864 = smul.u32 16, %s24
        %p1865 = scmp.lt.s32.totalorder %s22, 1
        %s1866 = scalar_select %p1865, %s22, 1
        %p1867 = scmp.lt.s32.totalorder %s1864, 15
        %s1868 = scalar_select %p1867, %s1864, 15
        %p1869 = scmp.lt.s32.totalorder %s23, 0
        %s1870 = scalar_select %p1869, %s23, 0
        %s1871 = smul.addr %s1868, 2
        %s1872 = sadd.s32 %s1870, %s1871
        %s1873 = smul.addr %s1866, 32
        %s1874 = sadd.s32 %s1872, %s1873
        %s1875 = smul.addr %s1874, 8
        %s1876 = scalar_lea.vmem %s3, %s1875
      $region44: #{base_conv_forward.1} parent=39 // pred_fallthru
        _
    $region40: #{base_conv_forward.1} parent=5 // pred_fallthru
      _
  $region6: #{base_conv_forward.1} parent=0 // loop_footer
    %s13 = sadd.s32 1, %s9
  $region7: #{base_conv_forward.1} parent=0 // loop_footer_branch
    %8 = sbr.rel target = $region3
  $region8: #{base_conv_forward.1} parent=0 // loop_exit
    _

</llo_original>
